<compile_context>
chip_gen: v7x
topology: tpu7x:2x2x1
jax: 0.10.0
libtpu: 0.0.40
codegen_flags: <defaults>
</compile_context>

<pallas_src>
import functools

import jax
import jax.numpy as jnp
from jax import lax
from jax.experimental import pallas as pl
from jax.experimental.pallas import tpu as pltpu


def _round8(c):
    return ((c + 7) // 8) * 8


# ----------------------------------------------------------------------------
# Fused residual-block kernel (one grid step = one batch sample)
# ----------------------------------------------------------------------------
def _residual_block_kernel(*refs, stride, identity, cin, cout, h, w, ho, wo):
    it = iter(refs)
    x_ref = next(it)                                   # (1, cin, P_in)
    m_in_ref = next(it)                                # (9, P_in) 0/1 masks
    m_out_ref = next(it)                               # (9, P_out)
    sel_ref = next(it) if stride == 2 else None        # (P_in, P_out) 0/1
    w1_ref, s1_ref, b1_ref = next(it), next(it), next(it)
    w2_ref, s2_ref, b2_ref = next(it), next(it), next(it)
    w3_ref, s3_ref, b3_ref = next(it), next(it), next(it)
    wid_ref = next(it) if identity else None           # (cout, cin)
    sw1_ref, ss1_ref, sb1_ref = next(it), next(it), next(it)
    sw2_ref, ss2_ref, sb2_ref = next(it), next(it), next(it)
    o_ref = next(it)                                   # (1, cout, P_out) f32
    xpad_ref = next(it)                                # (cin,  P_in + 2*(w+1))
    apad_ref = next(it)                                # (cout, P_out + 2*(wo+1))
    col_ref = next(it)                                 # (9*rpt_max, P_in)

    p_in, p_out = h * w, ho * wo
    pad_in, pad_out = w + 1, wo + 1
    cd = col_ref.dtype                                 # MXU operand dtype

    # Zero the staging / im2col scratch once per sample.  This provides the
    # implicit zero padding for the 3x3 convs and the unused im2col rows.
    xpad_ref[...] = jnp.zeros(xpad_ref.shape, xpad_ref.dtype)
    apad_ref[...] = jnp.zeros(apad_ref.shape, apad_ref.dtype)
    col_ref[...] = jnp.zeros(col_ref.shape, col_ref.dtype)

    # Stage this sample: channels on sublanes, flattened pixels on lanes.
    xpad_ref[:, pad_in:pad_in + p_in] = x_ref[0]

    def conv3x3_bn(src_ref, c, width, pad, npix, masks_ref, w_ref, s_ref,
                   b_ref, relu):
        rpt = _round8(c)
        # Build the (9*rpt, npix) im2col tile from 9 statically shifted slices
        # of the zero-padded activation: taps are generated in VMEM (no HBM
        # blow-up), boundary pixels are masked to reproduce zero padding.
        for t in range(9):
            oy, ox = t // 3 - 1, t % 3 - 1
            delta = oy * width + ox
            tap = src_ref[0:c, pad + delta:pad + delta + npix]
            col_ref[rpt * t:rpt * t + c, 0:npix] = tap * masks_ref[t:t + 1, :]
        # Single MXU matmul per conv (f32 accumulate) + fused folded BN (+ReLU).
        acc = jnp.dot(w_ref[...], col_ref[0:9 * rpt, 0:npix],
                      preferred_element_type=jnp.float32)
        y = acc * s_ref[...] + b_ref[...]
        return jnp.maximum(y, 0.0) if relu else y

    # conv1 -> bn1 -> relu (computed at input resolution; decimated afterwards
    # with a 0/1 selection matmul when stride == 2).
    y = conv3x3_bn(xpad_ref, cin, w, pad_in, p_in, m_in_ref,
                   w1_ref, s1_ref, b1_ref, relu=True)
    if stride == 2:
        y = jnp.dot(y.astype(cd), sel_ref[...],
                    preferred_element_type=jnp.float32)
    apad_ref[0:cout, pad_out:pad_out + p_out] = y.astype(cd)

    # conv2 -> bn2 -> relu
    y = conv3x3_bn(apad_ref, cout, wo, pad_out, p_out, m_out_ref,
                   w2_ref, s2_ref, b2_ref, relu=True)
    apad_ref[0:cout, pad_out:pad_out + p_out] = y.astype(cd)

    # conv3 -> bn3
    y3 = conv3x3_bn(apad_ref, cout, wo, pad_out, p_out, m_out_ref,
                    w3_ref, s3_ref, b3_ref, relu=False)

    # ---- SE module: global avg pool -> 1x1/BN/ReLU -> 1x1/BN -> hardsigmoid.
    pooled = jnp.mean(y3, axis=1, keepdims=True)                 # (cout, 1)
    hid = jnp.dot(sw1_ref[...], pooled, preferred_element_type=jnp.float32)
    hid = jnp.maximum(hid * ss1_ref[...] + sb1_ref[...], 0.0)
    gate = jnp.dot(sw2_ref[...], hid, preferred_element_type=jnp.float32)
    gate = gate * ss2_ref[...] + sb2_ref[...]
    gate = jnp.clip(gate / 6.0 + 0.5, 0.0, 1.0)                  # hardsigmoid

    # ---- Skip path (1x1 projection when identity=True), fused in-kernel.
    x_val = x_ref[0]
    if identity:
        skip = jnp.dot(wid_ref[...], x_val, preferred_element_type=jnp.float32)
    else:
        skip = x_val.astype(jnp.float32)
    if stride == 2:
        skip = jnp.dot(skip.astype(cd), sel_ref[...],
                       preferred_element_type=jnp.float32)

    out = jnp.maximum(y3 * gate + skip, 0.0)                     # SE + residual + ReLU
    o_ref[0] = out.astype(o_ref.dtype)


# ----------------------------------------------------------------------------
# Wrapper-side layout plumbing (tiny host/XLA ops only, no 9x im2col in HBM)
# ----------------------------------------------------------------------------
def _tap_masks(h, w):
    """(9, h*w) 0/1 masks marking valid (non-padding) source pixels per tap."""
    hh = jnp.arange(h)[:, None]
    ww = jnp.arange(w)[None, :]
    rows = []
    for t in range(9):
        oy, ox = t // 3 - 1, t % 3 - 1
        ok = ((hh + oy >= 0) & (hh + oy < h) & (ww + ox >= 0) & (ww + ox < w))
        rows.append(ok.reshape(-1))
    return jnp.stack(rows, 0).astype(jnp.float32)


def _conv_w_mat(w_oihw):
    """OIHW (Co,Ci,3,3) -> (Co, 9*round8(Ci)) matching the in-kernel im2col."""
    co, ci = w_oihw.shape[:2]
    rpt = _round8(ci)
    wt = jnp.transpose(w_oihw, (0, 2, 3, 1)).reshape(co, 9, ci)
    wt = jnp.pad(wt, ((0, 0), (0, 0), (0, rpt - ci)))
    return wt.reshape(co, 9 * rpt)


def _sel_matrix(h, w, ho, wo, stride):
    """(h*w, ho*wo) 0/1 decimation matrix selecting the stride-s output grid."""
    src = (jnp.arange(ho)[:, None] * stride * w
           + jnp.arange(wo)[None, :] * stride).reshape(-1)
    return (jnp.arange(h * w)[:, None] == src[None, :]).astype(jnp.float32)


def _col(v):
    return v.reshape(-1, 1).astype(jnp.float32)


def residual_block_forward(x_nchw, p, identity=True, downsample=False,
                           compute_dtype=jnp.float32):
    n, cin, h, w = x_nchw.shape
    stride = 2 if downsample else 1
    ho = (h - 1) // stride + 1
    wo = (w - 1) // stride + 1
    cout = p["w1"].shape[0]
    assert identity or cin == cout, "identity=False requires Cin == Cout"
    p_in, p_out = h * w, ho * wo
    rpt_max = max(_round8(cin), _round8(cout))
    cd = compute_dtype

    inputs = [x_nchw.reshape(n, cin, p_in).astype(cd),
              _tap_masks(h, w).astype(cd),
              _tap_masks(ho, wo).astype(cd)]
    if stride == 2:
        inputs.append(_sel_matrix(h, w, ho, wo, stride).astype(cd))
    for i in (1, 2, 3):
        inputs += [_conv_w_mat(p[f"w{i}"]).astype(cd),
                   _col(p[f"s{i}"]), _col(p[f"b{i}"])]
    if identity:
        inputs.append(p["w_id"][:, :, 0, 0].astype(cd))
    inputs += [p["se_w1"][:, :, 0, 0].astype(jnp.float32),
               _col(p["se_s1"]), _col(p["se_b1"]),
               p["se_w2"][:, :, 0, 0].astype(jnp.float32),
               _col(p["se_s2"]), _col(p["se_b2"])]

    def full_spec(a):
        return pl.BlockSpec(a.shape, lambda i, _nd=a.ndim: (0,) * _nd)

    in_specs = ([pl.BlockSpec((1, cin, p_in), lambda i: (i, 0, 0))]
                + [full_spec(a) for a in inputs[1:]])

    kernel = functools.partial(
        _residual_block_kernel, stride=stride, identity=identity,
        cin=cin, cout=cout, h=h, w=w, ho=ho, wo=wo)

    out = pl.pallas_call(
        kernel,
        out_shape=jax.ShapeDtypeStruct((n, cout, p_out), jnp.float32),
        grid=(n,),
        in_specs=in_specs,
        out_specs=pl.BlockSpec((1, cout, p_out), lambda i: (i, 0, 0)),
        scratch_shapes=[
            pltpu.VMEM((cin, p_in + 2 * (w + 1)), cd),    # padded input staging
            pltpu.VMEM((cout, p_out + 2 * (wo + 1)), cd), # padded activation staging
            pltpu.VMEM((9 * rpt_max, p_in), cd),          # im2col tile
        ],
        compiler_params=pltpu.CompilerParams(
            dimension_semantics=("parallel",),
            vmem_limit_bytes=32 * 1024 * 1024),
    )(*inputs)

    return out.reshape(n, cout, ho, wo)


# ----------------------------------------------------------------------------
# Pure-JAX reference (lax.conv, HIGHEST precision) for correctness checks
# ----------------------------------------------------------------------------
def _ref_forward(x_nchw, p, identity=True, downsample=False):
    stride = 2 if downsample else 1

    def conv(x, w, s=1, pad=1):
        return lax.conv_general_dilated(
            x, w, (s, s), [(pad, pad), (pad, pad)],
            dimension_numbers=("NCHW", "OIHW", "NCHW"),
            precision=lax.Precision.HIGHEST)

    def bn(x, scale, bias):
        return x * scale[None, :, None, None] + bias[None, :, None, None]

    out = jax.nn.relu(bn(conv(x_nchw, p["w1"], stride), p["s1"], p["b1"]))
    out = jax.nn.relu(bn(conv(out, p["w2"]), p["s2"], p["b2"]))
    out = bn(conv(out, p["w3"]), p["s3"], p["b3"])
    pooled = out.mean(axis=(2, 3), keepdims=True)
    hid = jax.nn.relu(bn(conv(pooled, p["se_w1"], 1, 0), p["se_s1"], p["se_b1"]))
    gate = bn(conv(hid, p["se_w2"], 1, 0), p["se_s2"], p["se_b2"])
    gate = jnp.clip(gate / 6.0 + 0.5, 0.0, 1.0)
    out = out * gate
    skip = conv(x_nchw, p["w_id"], stride, 0) if identity else x_nchw
    return jax.nn.relu(out + skip)


# ----------------------------------------------------------------------------
# Deterministic parameter construction (eval-mode folded BatchNorm)
# ----------------------------------------------------------------------------
def make_params(key, in_channels=4, identity=True):
    cout = in_channels * 2 if identity else in_channels
    cmid = cout // 4  # SEModule r=4
    ks = jax.random.split(key, 11)

    def wgt(k, shape):
        return (0.1 * jax.random.normal(k, shape)).astype(jnp.float32)

    def bn_fold(k, c):
        k1, k2, k3, k4 = jax.random.split(k, 4)
        gamma = 1.0 + 0.1 * jax.random.normal(k1, (c,))
        beta = 0.1 * jax.random.normal(k2, (c,))
        mean = 0.1 * jax.random.normal(k3, (c,))
        var = 0.5 + 0.1 * jnp.abs(jax.random.normal(k4, (c,)))
        scale = gamma / jnp.sqrt(var + 1e-5)
        bias = beta - mean * scale
        return scale.astype(jnp.float32), bias.astype(jnp.float32)

    p = {}
    p["w1"] = wgt(ks[0], (cout, in_channels, 3, 3)); p["s1"], p["b1"] = bn_fold(ks[1], cout)
    p["w2"] = wgt(ks[2], (cout, cout, 3, 3));        p["s2"], p["b2"] = bn_fold(ks[3], cout)
    p["w3"] = wgt(ks[4], (cout, cout, 3, 3));        p["s3"], p["b3"] = bn_fold(ks[5], cout)
    p["se_w1"] = wgt(ks[6], (cmid, cout, 1, 1));     p["se_s1"], p["se_b1"] = bn_fold(ks[7], cmid)
    p["se_w2"] = wgt(ks[8], (cout, cmid, 1, 1));     p["se_s2"], p["se_b2"] = bn_fold(ks[9], cout)
    p["w_id"] = wgt(ks[10], (cout, in_channels, 1, 1))
    return p


if __name__ == "__main__":
    key = jax.random.PRNGKey(0)
    kx, kp, kp2 = jax.random.split(key, 3)
    x = jax.random.normal(kx, (2, 4, 16, 16), dtype=jnp.float32)

    # --- Config 1: identity=True, downsample=False (primary), f32 compute ---
    params = make_params(kp, in_channels=4, identity=True)
    out = jax.block_until_ready(residual_block_forward(x, params, True, False))
    assert out.shape == (2, 8, 16, 16), out.shape
    ref = _ref_forward(x, params, True, False)
    err = float(jnp.max(jnp.abs(out - ref)))
    assert err < 2e-3, f"f32 max abs err {err}"

    # --- Config 2: bf16 MXU operands (f32 accumulate / BN / SE math) ---
    out_bf16 = jax.block_until_ready(
        residual_block_forward(x, params, True, False,
                               compute_dtype=jnp.bfloat16))
    err = float(jnp.max(jnp.abs(out_bf16 - ref)))
    assert err < 1e-1, f"bf16 max abs err {err}"

    # --- Config 3: downsample=True (stride-2) path ---
    out_ds = jax.block_until_ready(residual_block_forward(x, params, True, True))
    assert out_ds.shape == (2, 8, 8, 8), out_ds.shape
    ref_ds = _ref_forward(x, params, True, True)
    err = float(jnp.max(jnp.abs(out_ds - ref_ds)))
    assert err < 2e-3, f"stride-2 max abs err {err}"

    # --- Config 4: identity=False (Cout == Cin, plain additive skip) ---
    params2 = make_params(kp2, in_channels=4, identity=False)
    out_id = jax.block_until_ready(
        residual_block_forward(x, params2, False, False))
    assert out_id.shape == (2, 4, 16, 16), out_id.shape
    ref_id = _ref_forward(x, params2, False, False)
    err = float(jnp.max(jnp.abs(out_id - ref_id)))
    assert err < 2e-3, f"identity=False max abs err {err}"

    print("KERNEL_OK")
</pallas_src>

<mosaic_0001>
module attributes {stable_mosaic.version = 11 : i64} {
  func.func @_residual_block_kernel(%arg0: i32, %arg1: memref<1x4x256xf32, #tpu.memory_space<vmem>>, %arg2: memref<9x256xf32, #tpu.memory_space<vmem>>, %arg3: memref<9x256xf32, #tpu.memory_space<vmem>>, %arg4: memref<8x72xf32, #tpu.memory_space<vmem>>, %arg5: memref<8x1xf32, #tpu.memory_space<vmem>>, %arg6: memref<8x1xf32, #tpu.memory_space<vmem>>, %arg7: memref<8x72xf32, #tpu.memory_space<vmem>>, %arg8: memref<8x1xf32, #tpu.memory_space<vmem>>, %arg9: memref<8x1xf32, #tpu.memory_space<vmem>>, %arg10: memref<8x72xf32, #tpu.memory_space<vmem>>, %arg11: memref<8x1xf32, #tpu.memory_space<vmem>>, %arg12: memref<8x1xf32, #tpu.memory_space<vmem>>, %arg13: memref<8x4xf32, #tpu.memory_space<vmem>>, %arg14: memref<2x8xf32, #tpu.memory_space<vmem>>, %arg15: memref<2x1xf32, #tpu.memory_space<vmem>>, %arg16: memref<2x1xf32, #tpu.memory_space<vmem>>, %arg17: memref<8x2xf32, #tpu.memory_space<vmem>>, %arg18: memref<8x1xf32, #tpu.memory_space<vmem>>, %arg19: memref<8x1xf32, #tpu.memory_space<vmem>>, %arg20: memref<1x8x256xf32, #tpu.memory_space<vmem>>, %arg21: memref<4x290xf32, #tpu.memory_space<vmem>>, %arg22: memref<8x290xf32, #tpu.memory_space<vmem>>, %arg23: memref<72x256xf32, #tpu.memory_space<vmem>>) attributes {dimension_semantics = [#tpu.dimension_semantics<parallel>], iteration_bounds = array<i64: 2>, scalar_prefetch = 0 : i64, scratch_operands = 3 : i64, tpu.core_type = #tpu.core_type<tc>, window_params = [{transform_indices = @transform_0, window_bounds = array<i64: 1, 4, 256>}, {pipeline_mode = #tpu.pipeline_mode<synchronous>, transform_indices = @transform_1, window_bounds = array<i64: 9, 256>}, {pipeline_mode = #tpu.pipeline_mode<synchronous>, transform_indices = @transform_2, window_bounds = array<i64: 9, 256>}, {pipeline_mode = #tpu.pipeline_mode<synchronous>, transform_indices = @transform_3, window_bounds = array<i64: 8, 72>}, {pipeline_mode = #tpu.pipeline_mode<synchronous>, transform_indices = @transform_4, window_bounds = array<i64: 8, 1>}, {pipeline_mode = #tpu.pipeline_mode<synchronous>, transform_indices = @transform_5, window_bounds = array<i64: 8, 1>}, {pipeline_mode = #tpu.pipeline_mode<synchronous>, transform_indices = @transform_6, window_bounds = array<i64: 8, 72>}, {pipeline_mode = #tpu.pipeline_mode<synchronous>, transform_indices = @transform_7, window_bounds = array<i64: 8, 1>}, {pipeline_mode = #tpu.pipeline_mode<synchronous>, transform_indices = @transform_8, window_bounds = array<i64: 8, 1>}, {pipeline_mode = #tpu.pipeline_mode<synchronous>, transform_indices = @transform_9, window_bounds = array<i64: 8, 72>}, {pipeline_mode = #tpu.pipeline_mode<synchronous>, transform_indices = @transform_10, window_bounds = array<i64: 8, 1>}, {pipeline_mode = #tpu.pipeline_mode<synchronous>, transform_indices = @transform_11, window_bounds = array<i64: 8, 1>}, {pipeline_mode = #tpu.pipeline_mode<synchronous>, transform_indices = @transform_12, window_bounds = array<i64: 8, 4>}, {pipeline_mode = #tpu.pipeline_mode<synchronous>, transform_indices = @transform_13, window_bounds = array<i64: 2, 8>}, {pipeline_mode = #tpu.pipeline_mode<synchronous>, transform_indices = @transform_14, window_bounds = array<i64: 2, 1>}, {pipeline_mode = #tpu.pipeline_mode<synchronous>, transform_indices = @transform_15, window_bounds = array<i64: 2, 1>}, {pipeline_mode = #tpu.pipeline_mode<synchronous>, transform_indices = @transform_16, window_bounds = array<i64: 8, 2>}, {pipeline_mode = #tpu.pipeline_mode<synchronous>, transform_indices = @transform_17, window_bounds = array<i64: 8, 1>}, {pipeline_mode = #tpu.pipeline_mode<synchronous>, transform_indices = @transform_18, window_bounds = array<i64: 8, 1>}, {transform_indices = @transform_19, window_bounds = array<i64: 1, 8, 256>}]} {
    %cst = arith.constant 0.000000e+00 : f32
    %0 = vector.broadcast %cst : f32 to vector<4x290xf32>
    %c0 = arith.constant 0 : index
    %c0_0 = arith.constant 0 : index
    %1 = vector.load %arg21[%c0, %c0_0] : memref<4x290xf32, #tpu.memory_space<vmem>>, vector<4x290xf32>
    tpu.vector_store %arg21[%c0, %c0_0], %0 {strides = array<i32>} : memref<4x290xf32, #tpu.memory_space<vmem>>, vector<4x290xf32>,
    %cst_1 = arith.constant 0.000000e+00 : f32
    %2 = vector.broadcast %cst_1 : f32 to vector<8x290xf32>
    %c0_2 = arith.constant 0 : index
    %c0_3 = arith.constant 0 : index
    %3 = vector.load %arg22[%c0_2, %c0_3] : memref<8x290xf32, #tpu.memory_space<vmem>>, vector<8x290xf32>
    tpu.vector_store %arg22[%c0_2, %c0_3], %2 {strides = array<i32>} : memref<8x290xf32, #tpu.memory_space<vmem>>, vector<8x290xf32>,
    %cst_4 = arith.constant 0.000000e+00 : f32
    %4 = vector.broadcast %cst_4 : f32 to vector<72x256xf32>
    %c0_5 = arith.constant 0 : index
    %c0_6 = arith.constant 0 : index
    %5 = vector.load %arg23[%c0_5, %c0_6] : memref<72x256xf32, #tpu.memory_space<vmem>>, vector<72x256xf32>
    tpu.vector_store %arg23[%c0_5, %c0_6], %4 {strides = array<i32>} : memref<72x256xf32, #tpu.memory_space<vmem>>, vector<72x256xf32>,
    %c0_7 = arith.constant 0 : index
    %c0_8 = arith.constant 0 : index
    %c0_9 = arith.constant 0 : index
    %6 = vector.load %arg1[%c0_7, %c0_8, %c0_9] : memref<1x4x256xf32, #tpu.memory_space<vmem>>, vector<1x4x256xf32>
    %7 = vector.shape_cast %6 : vector<1x4x256xf32> to vector<4x256xf32>
    %c0_10 = arith.constant 0 : index
    %c17 = arith.constant 17 : index
    %8 = vector.load %arg21[%c0_10, %c17] : memref<4x290xf32, #tpu.memory_space<vmem>>, vector<4x256xf32>
    tpu.vector_store %arg21[%c0_10, %c17], %7 {strides = array<i32>} : memref<4x290xf32, #tpu.memory_space<vmem>>, vector<4x256xf32>,
    %c0_11 = arith.constant 0 : index
    %c0_12 = arith.constant 0 : index
    %9 = vector.load %arg21[%c0_11, %c0_12] : memref<4x290xf32, #tpu.memory_space<vmem>>, vector<4x256xf32>
    %c0_13 = arith.constant 0 : index
    %c0_14 = arith.constant 0 : index
    %10 = vector.load %arg2[%c0_13, %c0_14] : memref<9x256xf32, #tpu.memory_space<vmem>>, vector<1x256xf32>
    %11 = vector.broadcast %10 : vector<1x256xf32> to vector<4x256xf32>
    %12 = arith.mulf %9, %11 : vector<4x256xf32>
    %c0_15 = arith.constant 0 : index
    %c0_16 = arith.constant 0 : index
    %13 = vector.load %arg23[%c0_15, %c0_16] : memref<72x256xf32, #tpu.memory_space<vmem>>, vector<4x256xf32>
    tpu.vector_store %arg23[%c0_15, %c0_16], %12 {strides = array<i32>} : memref<72x256xf32, #tpu.memory_space<vmem>>, vector<4x256xf32>,
    %c0_17 = arith.constant 0 : index
    %c1 = arith.constant 1 : index
    %14 = vector.load %arg21[%c0_17, %c1] : memref<4x290xf32, #tpu.memory_space<vmem>>, vector<4x256xf32>
    %c1_18 = arith.constant 1 : index
    %c0_19 = arith.constant 0 : index
    %15 = vector.load %arg2[%c1_18, %c0_19] : memref<9x256xf32, #tpu.memory_space<vmem>>, vector<1x256xf32>
    %16 = vector.broadcast %15 : vector<1x256xf32> to vector<4x256xf32>
    %17 = arith.mulf %14, %16 : vector<4x256xf32>
    %c8 = arith.constant 8 : index
    %c0_20 = arith.constant 0 : index
    %18 = vector.load %arg23[%c8, %c0_20] : memref<72x256xf32, #tpu.memory_space<vmem>>, vector<4x256xf32>
    tpu.vector_store %arg23[%c8, %c0_20], %17 {strides = array<i32>} : memref<72x256xf32, #tpu.memory_space<vmem>>, vector<4x256xf32>,
    %c0_21 = arith.constant 0 : index
    %c2 = arith.constant 2 : index
    %19 = vector.load %arg21[%c0_21, %c2] : memref<4x290xf32, #tpu.memory_space<vmem>>, vector<4x256xf32>
    %c2_22 = arith.constant 2 : index
    %c0_23 = arith.constant 0 : index
    %20 = vector.load %arg2[%c2_22, %c0_23] : memref<9x256xf32, #tpu.memory_space<vmem>>, vector<1x256xf32>
    %21 = vector.broadcast %20 : vector<1x256xf32> to vector<4x256xf32>
    %22 = arith.mulf %19, %21 : vector<4x256xf32>
    %c16 = arith.constant 16 : index
    %c0_24 = arith.constant 0 : index
    %23 = vector.load %arg23[%c16, %c0_24] : memref<72x256xf32, #tpu.memory_space<vmem>>, vector<4x256xf32>
    tpu.vector_store %arg23[%c16, %c0_24], %22 {strides = array<i32>} : memref<72x256xf32, #tpu.memory_space<vmem>>, vector<4x256xf32>,
    %c0_25 = arith.constant 0 : index
    %c16_26 = arith.constant 16 : index
    %24 = vector.load %arg21[%c0_25, %c16_26] : memref<4x290xf32, #tpu.memory_space<vmem>>, vector<4x256xf32>
    %c3 = arith.constant 3 : index
    %c0_27 = arith.constant 0 : index
    %25 = vector.load %arg2[%c3, %c0_27] : memref<9x256xf32, #tpu.memory_space<vmem>>, vector<1x256xf32>
    %26 = vector.broadcast %25 : vector<1x256xf32> to vector<4x256xf32>
    %27 = arith.mulf %24, %26 : vector<4x256xf32>
    %c24 = arith.constant 24 : index
    %c0_28 = arith.constant 0 : index
    %28 = vector.load %arg23[%c24, %c0_28] : memref<72x256xf32, #tpu.memory_space<vmem>>, vector<4x256xf32>
    tpu.vector_store %arg23[%c24, %c0_28], %27 {strides = array<i32>} : memref<72x256xf32, #tpu.memory_space<vmem>>, vector<4x256xf32>,
    %c0_29 = arith.constant 0 : index
    %c17_30 = arith.constant 17 : index
    %29 = vector.load %arg21[%c0_29, %c17_30] : memref<4x290xf32, #tpu.memory_space<vmem>>, vector<4x256xf32>
    %c4 = arith.constant 4 : index
    %c0_31 = arith.constant 0 : index
    %30 = vector.load %arg2[%c4, %c0_31] : memref<9x256xf32, #tpu.memory_space<vmem>>, vector<1x256xf32>
    %31 = vector.broadcast %30 : vector<1x256xf32> to vector<4x256xf32>
    %32 = arith.mulf %29, %31 : vector<4x256xf32>
    %c32 = arith.constant 32 : index
    %c0_32 = arith.constant 0 : index
    %33 = vector.load %arg23[%c32, %c0_32] : memref<72x256xf32, #tpu.memory_space<vmem>>, vector<4x256xf32>
    tpu.vector_store %arg23[%c32, %c0_32], %32 {strides = array<i32>} : memref<72x256xf32, #tpu.memory_space<vmem>>, vector<4x256xf32>,
    %c0_33 = arith.constant 0 : index
    %c18 = arith.constant 18 : index
    %34 = vector.load %arg21[%c0_33, %c18] : memref<4x290xf32, #tpu.memory_space<vmem>>, vector<4x256xf32>
    %c5 = arith.constant 5 : index
    %c0_34 = arith.constant 0 : index
    %35 = vector.load %arg2[%c5, %c0_34] : memref<9x256xf32, #tpu.memory_space<vmem>>, vector<1x256xf32>
    %36 = vector.broadcast %35 : vector<1x256xf32> to vector<4x256xf32>
    %37 = arith.mulf %34, %36 : vector<4x256xf32>
    %c40 = arith.constant 40 : index
    %c0_35 = arith.constant 0 : index
    %38 = vector.load %arg23[%c40, %c0_35] : memref<72x256xf32, #tpu.memory_space<vmem>>, vector<4x256xf32>
    tpu.vector_store %arg23[%c40, %c0_35], %37 {strides = array<i32>} : memref<72x256xf32, #tpu.memory_space<vmem>>, vector<4x256xf32>,
    %c0_36 = arith.constant 0 : index
    %c32_37 = arith.constant 32 : index
    %39 = vector.load %arg21[%c0_36, %c32_37] : memref<4x290xf32, #tpu.memory_space<vmem>>, vector<4x256xf32>
    %c6 = arith.constant 6 : index
    %c0_38 = arith.constant 0 : index
    %40 = vector.load %arg2[%c6, %c0_38] : memref<9x256xf32, #tpu.memory_space<vmem>>, vector<1x256xf32>
    %41 = vector.broadcast %40 : vector<1x256xf32> to vector<4x256xf32>
    %42 = arith.mulf %39, %41 : vector<4x256xf32>
    %c48 = arith.constant 48 : index
    %c0_39 = arith.constant 0 : index
    %43 = vector.load %arg23[%c48, %c0_39] : memref<72x256xf32, #tpu.memory_space<vmem>>, vector<4x256xf32>
    tpu.vector_store %arg23[%c48, %c0_39], %42 {strides = array<i32>} : memref<72x256xf32, #tpu.memory_space<vmem>>, vector<4x256xf32>,
    %c0_40 = arith.constant 0 : index
    %c33 = arith.constant 33 : index
    %44 = vector.load %arg21[%c0_40, %c33] : memref<4x290xf32, #tpu.memory_space<vmem>>, vector<4x256xf32>
    %c7 = arith.constant 7 : index
    %c0_41 = arith.constant 0 : index
    %45 = vector.load %arg2[%c7, %c0_41] : memref<9x256xf32, #tpu.memory_space<vmem>>, vector<1x256xf32>
    %46 = vector.broadcast %45 : vector<1x256xf32> to vector<4x256xf32>
    %47 = arith.mulf %44, %46 : vector<4x256xf32>
    %c56 = arith.constant 56 : index
    %c0_42 = arith.constant 0 : index
    %48 = vector.load %arg23[%c56, %c0_42] : memref<72x256xf32, #tpu.memory_space<vmem>>, vector<4x256xf32>
    tpu.vector_store %arg23[%c56, %c0_42], %47 {strides = array<i32>} : memref<72x256xf32, #tpu.memory_space<vmem>>, vector<4x256xf32>,
    %c0_43 = arith.constant 0 : index
    %c34 = arith.constant 34 : index
    %49 = vector.load %arg21[%c0_43, %c34] : memref<4x290xf32, #tpu.memory_space<vmem>>, vector<4x256xf32>
    %c8_44 = arith.constant 8 : index
    %c0_45 = arith.constant 0 : index
    %50 = vector.load %arg2[%c8_44, %c0_45] : memref<9x256xf32, #tpu.memory_space<vmem>>, vector<1x256xf32>
    %51 = vector.broadcast %50 : vector<1x256xf32> to vector<4x256xf32>
    %52 = arith.mulf %49, %51 : vector<4x256xf32>
    %c64 = arith.constant 64 : index
    %c0_46 = arith.constant 0 : index
    %53 = vector.load %arg23[%c64, %c0_46] : memref<72x256xf32, #tpu.memory_space<vmem>>, vector<4x256xf32>
    tpu.vector_store %arg23[%c64, %c0_46], %52 {strides = array<i32>} : memref<72x256xf32, #tpu.memory_space<vmem>>, vector<4x256xf32>,
    %c0_47 = arith.constant 0 : index
    %c0_48 = arith.constant 0 : index
    %54 = vector.load %arg4[%c0_47, %c0_48] : memref<8x72xf32, #tpu.memory_space<vmem>>, vector<8x72xf32>
    %c0_49 = arith.constant 0 : index
    %c0_50 = arith.constant 0 : index
    %55 = vector.load %arg23[%c0_49, %c0_50] : memref<72x256xf32, #tpu.memory_space<vmem>>, vector<72x256xf32>
    %cst_51 = arith.constant dense<0.000000e+00> : vector<8x256xf32>
    %56 = tpu.matmul %54, %55, %cst_51 {dimension_numbers = #tpu.dot_dimension_numbers<[1], [0], [0], [1], [0, 0, 1, 1], [], []>} : vector<8x72xf32>, vector<72x256xf32>, vector<8x256xf32> -> vector<8x256xf32>
    %c0_52 = arith.constant 0 : index
    %c0_53 = arith.constant 0 : index
    %57 = vector.load %arg5[%c0_52, %c0_53] : memref<8x1xf32, #tpu.memory_space<vmem>>, vector<8x1xf32>
    %58 = vector.broadcast %57 : vector<8x1xf32> to vector<8x256xf32>
    %59 = arith.mulf %56, %58 : vector<8x256xf32>
    %c0_54 = arith.constant 0 : index
    %c0_55 = arith.constant 0 : index
    %60 = vector.load %arg6[%c0_54, %c0_55] : memref<8x1xf32, #tpu.memory_space<vmem>>, vector<8x1xf32>
    %61 = vector.broadcast %60 : vector<8x1xf32> to vector<8x256xf32>
    %62 = arith.addf %59, %61 : vector<8x256xf32>
    %cst_56 = arith.constant 0.000000e+00 : f32
    %63 = vector.broadcast %cst_56 : f32 to vector<8x256xf32>
    %64 = arith.maximumf %62, %63 : vector<8x256xf32>
    %c0_57 = arith.constant 0 : index
    %c17_58 = arith.constant 17 : index
    %65 = vector.load %arg22[%c0_57, %c17_58] : memref<8x290xf32, #tpu.memory_space<vmem>>, vector<8x256xf32>
    tpu.vector_store %arg22[%c0_57, %c17_58], %64 {strides = array<i32>} : memref<8x290xf32, #tpu.memory_space<vmem>>, vector<8x256xf32>,
    %c0_59 = arith.constant 0 : index
    %c0_60 = arith.constant 0 : index
    %66 = vector.load %arg22[%c0_59, %c0_60] : memref<8x290xf32, #tpu.memory_space<vmem>>, vector<8x256xf32>
    %c0_61 = arith.constant 0 : index
    %c0_62 = arith.constant 0 : index
    %67 = vector.load %arg3[%c0_61, %c0_62] : memref<9x256xf32, #tpu.memory_space<vmem>>, vector<1x256xf32>
    %68 = vector.broadcast %67 : vector<1x256xf32> to vector<8x256xf32>
    %69 = arith.mulf %66, %68 : vector<8x256xf32>
    %c0_63 = arith.constant 0 : index
    %c0_64 = arith.constant 0 : index
    %70 = vector.load %arg23[%c0_63, %c0_64] : memref<72x256xf32, #tpu.memory_space<vmem>>, vector<8x256xf32>
    tpu.vector_store %arg23[%c0_63, %c0_64], %69 {strides = array<i32>} : memref<72x256xf32, #tpu.memory_space<vmem>>, vector<8x256xf32>,
    %c0_65 = arith.constant 0 : index
    %c1_66 = arith.constant 1 : index
    %71 = vector.load %arg22[%c0_65, %c1_66] : memref<8x290xf32, #tpu.memory_space<vmem>>, vector<8x256xf32>
    %c1_67 = arith.constant 1 : index
    %c0_68 = arith.constant 0 : index
    %72 = vector.load %arg3[%c1_67, %c0_68] : memref<9x256xf32, #tpu.memory_space<vmem>>, vector<1x256xf32>
    %73 = vector.broadcast %72 : vector<1x256xf32> to vector<8x256xf32>
    %74 = arith.mulf %71, %73 : vector<8x256xf32>
    %c8_69 = arith.constant 8 : index
    %c0_70 = arith.constant 0 : index
    %75 = vector.load %arg23[%c8_69, %c0_70] : memref<72x256xf32, #tpu.memory_space<vmem>>, vector<8x256xf32>
    tpu.vector_store %arg23[%c8_69, %c0_70], %74 {strides = array<i32>} : memref<72x256xf32, #tpu.memory_space<vmem>>, vector<8x256xf32>,
    %c0_71 = arith.constant 0 : index
    %c2_72 = arith.constant 2 : index
    %76 = vector.load %arg22[%c0_71, %c2_72] : memref<8x290xf32, #tpu.memory_space<vmem>>, vector<8x256xf32>
    %c2_73 = arith.constant 2 : index
    %c0_74 = arith.constant 0 : index
    %77 = vector.load %arg3[%c2_73, %c0_74] : memref<9x256xf32, #tpu.memory_space<vmem>>, vector<1x256xf32>
    %78 = vector.broadcast %77 : vector<1x256xf32> to vector<8x256xf32>
    %79 = arith.mulf %76, %78 : vector<8x256xf32>
    %c16_75 = arith.constant 16 : index
    %c0_76 = arith.constant 0 : index
    %80 = vector.load %arg23[%c16_75, %c0_76] : memref<72x256xf32, #tpu.memory_space<vmem>>, vector<8x256xf32>
    tpu.vector_store %arg23[%c16_75, %c0_76], %79 {strides = array<i32>} : memref<72x256xf32, #tpu.memory_space<vmem>>, vector<8x256xf32>,
    %c0_77 = arith.constant 0 : index
    %c16_78 = arith.constant 16 : index
    %81 = vector.load %arg22[%c0_77, %c16_78] : memref<8x290xf32, #tpu.memory_space<vmem>>, vector<8x256xf32>
    %c3_79 = arith.constant 3 : index
    %c0_80 = arith.constant 0 : index
    %82 = vector.load %arg3[%c3_79, %c0_80] : memref<9x256xf32, #tpu.memory_space<vmem>>, vector<1x256xf32>
    %83 = vector.broadcast %82 : vector<1x256xf32> to vector<8x256xf32>
    %84 = arith.mulf %81, %83 : vector<8x256xf32>
    %c24_81 = arith.constant 24 : index
    %c0_82 = arith.constant 0 : index
    %85 = vector.load %arg23[%c24_81, %c0_82] : memref<72x256xf32, #tpu.memory_space<vmem>>, vector<8x256xf32>
    tpu.vector_store %arg23[%c24_81, %c0_82], %84 {strides = array<i32>} : memref<72x256xf32, #tpu.memory_space<vmem>>, vector<8x256xf32>,
    %c0_83 = arith.constant 0 : index
    %c17_84 = arith.constant 17 : index
    %86 = vector.load %arg22[%c0_83, %c17_84] : memref<8x290xf32, #tpu.memory_space<vmem>>, vector<8x256xf32>
    %c4_85 = arith.constant 4 : index
    %c0_86 = arith.constant 0 : index
    %87 = vector.load %arg3[%c4_85, %c0_86] : memref<9x256xf32, #tpu.memory_space<vmem>>, vector<1x256xf32>
    %88 = vector.broadcast %87 : vector<1x256xf32> to vector<8x256xf32>
    %89 = arith.mulf %86, %88 : vector<8x256xf32>
    %c32_87 = arith.constant 32 : index
    %c0_88 = arith.constant 0 : index
    %90 = vector.load %arg23[%c32_87, %c0_88] : memref<72x256xf32, #tpu.memory_space<vmem>>, vector<8x256xf32>
    tpu.vector_store %arg23[%c32_87, %c0_88], %89 {strides = array<i32>} : memref<72x256xf32, #tpu.memory_space<vmem>>, vector<8x256xf32>,
    %c0_89 = arith.constant 0 : index
    %c18_90 = arith.constant 18 : index
    %91 = vector.load %arg22[%c0_89, %c18_90] : memref<8x290xf32, #tpu.memory_space<vmem>>, vector<8x256xf32>
    %c5_91 = arith.constant 5 : index
    %c0_92 = arith.constant 0 : index
    %92 = vector.load %arg3[%c5_91, %c0_92] : memref<9x256xf32, #tpu.memory_space<vmem>>, vector<1x256xf32>
    %93 = vector.broadcast %92 : vector<1x256xf32> to vector<8x256xf32>
    %94 = arith.mulf %91, %93 : vector<8x256xf32>
    %c40_93 = arith.constant 40 : index
    %c0_94 = arith.constant 0 : index
    %95 = vector.load %arg23[%c40_93, %c0_94] : memref<72x256xf32, #tpu.memory_space<vmem>>, vector<8x256xf32>
    tpu.vector_store %arg23[%c40_93, %c0_94], %94 {strides = array<i32>} : memref<72x256xf32, #tpu.memory_space<vmem>>, vector<8x256xf32>,
    %c0_95 = arith.constant 0 : index
    %c32_96 = arith.constant 32 : index
    %96 = vector.load %arg22[%c0_95, %c32_96] : memref<8x290xf32, #tpu.memory_space<vmem>>, vector<8x256xf32>
    %c6_97 = arith.constant 6 : index
    %c0_98 = arith.constant 0 : index
    %97 = vector.load %arg3[%c6_97, %c0_98] : memref<9x256xf32, #tpu.memory_space<vmem>>, vector<1x256xf32>
    %98 = vector.broadcast %97 : vector<1x256xf32> to vector<8x256xf32>
    %99 = arith.mulf %96, %98 : vector<8x256xf32>
    %c48_99 = arith.constant 48 : index
    %c0_100 = arith.constant 0 : index
    %100 = vector.load %arg23[%c48_99, %c0_100] : memref<72x256xf32, #tpu.memory_space<vmem>>, vector<8x256xf32>
    tpu.vector_store %arg23[%c48_99, %c0_100], %99 {strides = array<i32>} : memref<72x256xf32, #tpu.memory_space<vmem>>, vector<8x256xf32>,
    %c0_101 = arith.constant 0 : index
    %c33_102 = arith.constant 33 : index
    %101 = vector.load %arg22[%c0_101, %c33_102] : memref<8x290xf32, #tpu.memory_space<vmem>>, vector<8x256xf32>
    %c7_103 = arith.constant 7 : index
    %c0_104 = arith.constant 0 : index
    %102 = vector.load %arg3[%c7_103, %c0_104] : memref<9x256xf32, #tpu.memory_space<vmem>>, vector<1x256xf32>
    %103 = vector.broadcast %102 : vector<1x256xf32> to vector<8x256xf32>
    %104 = arith.mulf %101, %103 : vector<8x256xf32>
    %c56_105 = arith.constant 56 : index
    %c0_106 = arith.constant 0 : index
    %105 = vector.load %arg23[%c56_105, %c0_106] : memref<72x256xf32, #tpu.memory_space<vmem>>, vector<8x256xf32>
    tpu.vector_store %arg23[%c56_105, %c0_106], %104 {strides = array<i32>} : memref<72x256xf32, #tpu.memory_space<vmem>>, vector<8x256xf32>,
    %c0_107 = arith.constant 0 : index
    %c34_108 = arith.constant 34 : index
    %106 = vector.load %arg22[%c0_107, %c34_108] : memref<8x290xf32, #tpu.memory_space<vmem>>, vector<8x256xf32>
    %c8_109 = arith.constant 8 : index
    %c0_110 = arith.constant 0 : index
    %107 = vector.load %arg3[%c8_109, %c0_110] : memref<9x256xf32, #tpu.memory_space<vmem>>, vector<1x256xf32>
    %108 = vector.broadcast %107 : vector<1x256xf32> to vector<8x256xf32>
    %109 = arith.mulf %106, %108 : vector<8x256xf32>
    %c64_111 = arith.constant 64 : index
    %c0_112 = arith.constant 0 : index
    %110 = vector.load %arg23[%c64_111, %c0_112] : memref<72x256xf32, #tpu.memory_space<vmem>>, vector<8x256xf32>
    tpu.vector_store %arg23[%c64_111, %c0_112], %109 {strides = array<i32>} : memref<72x256xf32, #tpu.memory_space<vmem>>, vector<8x256xf32>,
    %c0_113 = arith.constant 0 : index
    %c0_114 = arith.constant 0 : index
    %111 = vector.load %arg7[%c0_113, %c0_114] : memref<8x72xf32, #tpu.memory_space<vmem>>, vector<8x72xf32>
    %c0_115 = arith.constant 0 : index
    %c0_116 = arith.constant 0 : index
    %112 = vector.load %arg23[%c0_115, %c0_116] : memref<72x256xf32, #tpu.memory_space<vmem>>, vector<72x256xf32>
    %cst_117 = arith.constant dense<0.000000e+00> : vector<8x256xf32>
    %113 = tpu.matmul %111, %112, %cst_117 {dimension_numbers = #tpu.dot_dimension_numbers<[1], [0], [0], [1], [0, 0, 1, 1], [], []>} : vector<8x72xf32>, vector<72x256xf32>, vector<8x256xf32> -> vector<8x256xf32>
    %c0_118 = arith.constant 0 : index
    %c0_119 = arith.constant 0 : index
    %114 = vector.load %arg8[%c0_118, %c0_119] : memref<8x1xf32, #tpu.memory_space<vmem>>, vector<8x1xf32>
    %115 = vector.broadcast %114 : vector<8x1xf32> to vector<8x256xf32>
    %116 = arith.mulf %113, %115 : vector<8x256xf32>
    %c0_120 = arith.constant 0 : index
    %c0_121 = arith.constant 0 : index
    %117 = vector.load %arg9[%c0_120, %c0_121] : memref<8x1xf32, #tpu.memory_space<vmem>>, vector<8x1xf32>
    %118 = vector.broadcast %117 : vector<8x1xf32> to vector<8x256xf32>
    %119 = arith.addf %116, %118 : vector<8x256xf32>
    %cst_122 = arith.constant 0.000000e+00 : f32
    %120 = vector.broadcast %cst_122 : f32 to vector<8x256xf32>
    %121 = arith.maximumf %119, %120 : vector<8x256xf32>
    %c0_123 = arith.constant 0 : index
    %c17_124 = arith.constant 17 : index
    %122 = vector.load %arg22[%c0_123, %c17_124] : memref<8x290xf32, #tpu.memory_space<vmem>>, vector<8x256xf32>
    tpu.vector_store %arg22[%c0_123, %c17_124], %121 {strides = array<i32>} : memref<8x290xf32, #tpu.memory_space<vmem>>, vector<8x256xf32>,
    %c0_125 = arith.constant 0 : index
    %c0_126 = arith.constant 0 : index
    %123 = vector.load %arg22[%c0_125, %c0_126] : memref<8x290xf32, #tpu.memory_space<vmem>>, vector<8x256xf32>
    %c0_127 = arith.constant 0 : index
    %c0_128 = arith.constant 0 : index
    %124 = vector.load %arg3[%c0_127, %c0_128] : memref<9x256xf32, #tpu.memory_space<vmem>>, vector<1x256xf32>
    %125 = vector.broadcast %124 : vector<1x256xf32> to vector<8x256xf32>
    %126 = arith.mulf %123, %125 : vector<8x256xf32>
    %c0_129 = arith.constant 0 : index
    %c0_130 = arith.constant 0 : index
    %127 = vector.load %arg23[%c0_129, %c0_130] : memref<72x256xf32, #tpu.memory_space<vmem>>, vector<8x256xf32>
    tpu.vector_store %arg23[%c0_129, %c0_130], %126 {strides = array<i32>} : memref<72x256xf32, #tpu.memory_space<vmem>>, vector<8x256xf32>,
    %c0_131 = arith.constant 0 : index
    %c1_132 = arith.constant 1 : index
    %128 = vector.load %arg22[%c0_131, %c1_132] : memref<8x290xf32, #tpu.memory_space<vmem>>, vector<8x256xf32>
    %c1_133 = arith.constant 1 : index
    %c0_134 = arith.constant 0 : index
    %129 = vector.load %arg3[%c1_133, %c0_134] : memref<9x256xf32, #tpu.memory_space<vmem>>, vector<1x256xf32>
    %130 = vector.broadcast %129 : vector<1x256xf32> to vector<8x256xf32>
    %131 = arith.mulf %128, %130 : vector<8x256xf32>
    %c8_135 = arith.constant 8 : index
    %c0_136 = arith.constant 0 : index
    %132 = vector.load %arg23[%c8_135, %c0_136] : memref<72x256xf32, #tpu.memory_space<vmem>>, vector<8x256xf32>
    tpu.vector_store %arg23[%c8_135, %c0_136], %131 {strides = array<i32>} : memref<72x256xf32, #tpu.memory_space<vmem>>, vector<8x256xf32>,
    %c0_137 = arith.constant 0 : index
    %c2_138 = arith.constant 2 : index
    %133 = vector.load %arg22[%c0_137, %c2_138] : memref<8x290xf32, #tpu.memory_space<vmem>>, vector<8x256xf32>
    %c2_139 = arith.constant 2 : index
    %c0_140 = arith.constant 0 : index
    %134 = vector.load %arg3[%c2_139, %c0_140] : memref<9x256xf32, #tpu.memory_space<vmem>>, vector<1x256xf32>
    %135 = vector.broadcast %134 : vector<1x256xf32> to vector<8x256xf32>
    %136 = arith.mulf %133, %135 : vector<8x256xf32>
    %c16_141 = arith.constant 16 : index
    %c0_142 = arith.constant 0 : index
    %137 = vector.load %arg23[%c16_141, %c0_142] : memref<72x256xf32, #tpu.memory_space<vmem>>, vector<8x256xf32>
    tpu.vector_store %arg23[%c16_141, %c0_142], %136 {strides = array<i32>} : memref<72x256xf32, #tpu.memory_space<vmem>>, vector<8x256xf32>,
    %c0_143 = arith.constant 0 : index
    %c16_144 = arith.constant 16 : index
    %138 = vector.load %arg22[%c0_143, %c16_144] : memref<8x290xf32, #tpu.memory_space<vmem>>, vector<8x256xf32>
    %c3_145 = arith.constant 3 : index
    %c0_146 = arith.constant 0 : index
    %139 = vector.load %arg3[%c3_145, %c0_146] : memref<9x256xf32, #tpu.memory_space<vmem>>, vector<1x256xf32>
    %140 = vector.broadcast %139 : vector<1x256xf32> to vector<8x256xf32>
    %141 = arith.mulf %138, %140 : vector<8x256xf32>
    %c24_147 = arith.constant 24 : index
    %c0_148 = arith.constant 0 : index
    %142 = vector.load %arg23[%c24_147, %c0_148] : memref<72x256xf32, #tpu.memory_space<vmem>>, vector<8x256xf32>
    tpu.vector_store %arg23[%c24_147, %c0_148], %141 {strides = array<i32>} : memref<72x256xf32, #tpu.memory_space<vmem>>, vector<8x256xf32>,
    %c0_149 = arith.constant 0 : index
    %c17_150 = arith.constant 17 : index
    %143 = vector.load %arg22[%c0_149, %c17_150] : memref<8x290xf32, #tpu.memory_space<vmem>>, vector<8x256xf32>
    %c4_151 = arith.constant 4 : index
    %c0_152 = arith.constant 0 : index
    %144 = vector.load %arg3[%c4_151, %c0_152] : memref<9x256xf32, #tpu.memory_space<vmem>>, vector<1x256xf32>
    %145 = vector.broadcast %144 : vector<1x256xf32> to vector<8x256xf32>
    %146 = arith.mulf %143, %145 : vector<8x256xf32>
    %c32_153 = arith.constant 32 : index
    %c0_154 = arith.constant 0 : index
    %147 = vector.load %arg23[%c32_153, %c0_154] : memref<72x256xf32, #tpu.memory_space<vmem>>, vector<8x256xf32>
    tpu.vector_store %arg23[%c32_153, %c0_154], %146 {strides = array<i32>} : memref<72x256xf32, #tpu.memory_space<vmem>>, vector<8x256xf32>,
    %c0_155 = arith.constant 0 : index
    %c18_156 = arith.constant 18 : index
    %148 = vector.load %arg22[%c0_155, %c18_156] : memref<8x290xf32, #tpu.memory_space<vmem>>, vector<8x256xf32>
    %c5_157 = arith.constant 5 : index
    %c0_158 = arith.constant 0 : index
    %149 = vector.load %arg3[%c5_157, %c0_158] : memref<9x256xf32, #tpu.memory_space<vmem>>, vector<1x256xf32>
    %150 = vector.broadcast %149 : vector<1x256xf32> to vector<8x256xf32>
    %151 = arith.mulf %148, %150 : vector<8x256xf32>
    %c40_159 = arith.constant 40 : index
    %c0_160 = arith.constant 0 : index
    %152 = vector.load %arg23[%c40_159, %c0_160] : memref<72x256xf32, #tpu.memory_space<vmem>>, vector<8x256xf32>
    tpu.vector_store %arg23[%c40_159, %c0_160], %151 {strides = array<i32>} : memref<72x256xf32, #tpu.memory_space<vmem>>, vector<8x256xf32>,
    %c0_161 = arith.constant 0 : index
    %c32_162 = arith.constant 32 : index
    %153 = vector.load %arg22[%c0_161, %c32_162] : memref<8x290xf32, #tpu.memory_space<vmem>>, vector<8x256xf32>
    %c6_163 = arith.constant 6 : index
    %c0_164 = arith.constant 0 : index
    %154 = vector.load %arg3[%c6_163, %c0_164] : memref<9x256xf32, #tpu.memory_space<vmem>>, vector<1x256xf32>
    %155 = vector.broadcast %154 : vector<1x256xf32> to vector<8x256xf32>
    %156 = arith.mulf %153, %155 : vector<8x256xf32>
    %c48_165 = arith.constant 48 : index
    %c0_166 = arith.constant 0 : index
    %157 = vector.load %arg23[%c48_165, %c0_166] : memref<72x256xf32, #tpu.memory_space<vmem>>, vector<8x256xf32>
    tpu.vector_store %arg23[%c48_165, %c0_166], %156 {strides = array<i32>} : memref<72x256xf32, #tpu.memory_space<vmem>>, vector<8x256xf32>,
    %c0_167 = arith.constant 0 : index
    %c33_168 = arith.constant 33 : index
    %158 = vector.load %arg22[%c0_167, %c33_168] : memref<8x290xf32, #tpu.memory_space<vmem>>, vector<8x256xf32>
    %c7_169 = arith.constant 7 : index
    %c0_170 = arith.constant 0 : index
    %159 = vector.load %arg3[%c7_169, %c0_170] : memref<9x256xf32, #tpu.memory_space<vmem>>, vector<1x256xf32>
    %160 = vector.broadcast %159 : vector<1x256xf32> to vector<8x256xf32>
    %161 = arith.mulf %158, %160 : vector<8x256xf32>
    %c56_171 = arith.constant 56 : index
    %c0_172 = arith.constant 0 : index
    %162 = vector.load %arg23[%c56_171, %c0_172] : memref<72x256xf32, #tpu.memory_space<vmem>>, vector<8x256xf32>
    tpu.vector_store %arg23[%c56_171, %c0_172], %161 {strides = array<i32>} : memref<72x256xf32, #tpu.memory_space<vmem>>, vector<8x256xf32>,
    %c0_173 = arith.constant 0 : index
    %c34_174 = arith.constant 34 : index
    %163 = vector.load %arg22[%c0_173, %c34_174] : memref<8x290xf32, #tpu.memory_space<vmem>>, vector<8x256xf32>
    %c8_175 = arith.constant 8 : index
    %c0_176 = arith.constant 0 : index
    %164 = vector.load %arg3[%c8_175, %c0_176] : memref<9x256xf32, #tpu.memory_space<vmem>>, vector<1x256xf32>
    %165 = vector.broadcast %164 : vector<1x256xf32> to vector<8x256xf32>
    %166 = arith.mulf %163, %165 : vector<8x256xf32>
    %c64_177 = arith.constant 64 : index
    %c0_178 = arith.constant 0 : index
    %167 = vector.load %arg23[%c64_177, %c0_178] : memref<72x256xf32, #tpu.memory_space<vmem>>, vector<8x256xf32>
    tpu.vector_store %arg23[%c64_177, %c0_178], %166 {strides = array<i32>} : memref<72x256xf32, #tpu.memory_space<vmem>>, vector<8x256xf32>,
    %c0_179 = arith.constant 0 : index
    %c0_180 = arith.constant 0 : index
    %168 = vector.load %arg10[%c0_179, %c0_180] : memref<8x72xf32, #tpu.memory_space<vmem>>, vector<8x72xf32>
    %c0_181 = arith.constant 0 : index
    %c0_182 = arith.constant 0 : index
    %169 = vector.load %arg23[%c0_181, %c0_182] : memref<72x256xf32, #tpu.memory_space<vmem>>, vector<72x256xf32>
    %cst_183 = arith.constant dense<0.000000e+00> : vector<8x256xf32>
    %170 = tpu.matmul %168, %169, %cst_183 {dimension_numbers = #tpu.dot_dimension_numbers<[1], [0], [0], [1], [0, 0, 1, 1], [], []>} : vector<8x72xf32>, vector<72x256xf32>, vector<8x256xf32> -> vector<8x256xf32>
    %c0_184 = arith.constant 0 : index
    %c0_185 = arith.constant 0 : index
    %171 = vector.load %arg11[%c0_184, %c0_185] : memref<8x1xf32, #tpu.memory_space<vmem>>, vector<8x1xf32>
    %172 = vector.broadcast %171 : vector<8x1xf32> to vector<8x256xf32>
    %173 = arith.mulf %170, %172 : vector<8x256xf32>
    %c0_186 = arith.constant 0 : index
    %c0_187 = arith.constant 0 : index
    %174 = vector.load %arg12[%c0_186, %c0_187] : memref<8x1xf32, #tpu.memory_space<vmem>>, vector<8x1xf32>
    %175 = vector.broadcast %174 : vector<8x1xf32> to vector<8x256xf32>
    %176 = arith.addf %173, %175 : vector<8x256xf32>
    %cst_188 = arith.constant dense<0.000000e+00> : vector<8xf32>
    %177 = vector.multi_reduction <add>, %176, %cst_188 [1] : vector<8x256xf32> to vector<8xf32>
    %178 = vector.shape_cast %177 : vector<8xf32> to vector<8x1xf32>
    %cst_189 = arith.constant 2.560000e+02 : f32
    %179 = vector.broadcast %cst_189 : f32 to vector<8x1xf32>
    %180 = arith.divf %178, %179 : vector<8x1xf32>
    %c0_190 = arith.constant 0 : index
    %c0_191 = arith.constant 0 : index
    %181 = vector.load %arg14[%c0_190, %c0_191] : memref<2x8xf32, #tpu.memory_space<vmem>>, vector<2x8xf32>
    %cst_192 = arith.constant dense<0.000000e+00> : vector<2x1xf32>
    %182 = tpu.matmul %181, %180, %cst_192 {dimension_numbers = #tpu.dot_dimension_numbers<[1], [0], [0], [1], [0, 0, 1, 1], [], []>} : vector<2x8xf32>, vector<8x1xf32>, vector<2x1xf32> -> vector<2x1xf32>
    %c0_193 = arith.constant 0 : index
    %c0_194 = arith.constant 0 : index
    %183 = vector.load %arg15[%c0_193, %c0_194] : memref<2x1xf32, #tpu.memory_space<vmem>>, vector<2x1xf32>
    %184 = arith.mulf %182, %183 : vector<2x1xf32>
    %c0_195 = arith.constant 0 : index
    %c0_196 = arith.constant 0 : index
    %185 = vector.load %arg16[%c0_195, %c0_196] : memref<2x1xf32, #tpu.memory_space<vmem>>, vector<2x1xf32>
    %186 = arith.addf %184, %185 : vector<2x1xf32>
    %cst_197 = arith.constant 0.000000e+00 : f32
    %187 = vector.broadcast %cst_197 : f32 to vector<2x1xf32>
    %188 = arith.maximumf %186, %187 : vector<2x1xf32>
    %c0_198 = arith.constant 0 : index
    %c0_199 = arith.constant 0 : index
    %189 = vector.load %arg17[%c0_198, %c0_199] : memref<8x2xf32, #tpu.memory_space<vmem>>, vector<8x2xf32>
    %cst_200 = arith.constant dense<0.000000e+00> : vector<8x1xf32>
    %190 = tpu.matmul %189, %188, %cst_200 {dimension_numbers = #tpu.dot_dimension_numbers<[1], [0], [0], [1], [0, 0, 1, 1], [], []>} : vector<8x2xf32>, vector<2x1xf32>, vector<8x1xf32> -> vector<8x1xf32>
    %c0_201 = arith.constant 0 : index
    %c0_202 = arith.constant 0 : index
    %191 = vector.load %arg18[%c0_201, %c0_202] : memref<8x1xf32, #tpu.memory_space<vmem>>, vector<8x1xf32>
    %192 = arith.mulf %190, %191 : vector<8x1xf32>
    %c0_203 = arith.constant 0 : index
    %c0_204 = arith.constant 0 : index
    %193 = vector.load %arg19[%c0_203, %c0_204] : memref<8x1xf32, #tpu.memory_space<vmem>>, vector<8x1xf32>
    %194 = arith.addf %192, %193 : vector<8x1xf32>
    %cst_205 = arith.constant 6.000000e+00 : f32
    %195 = vector.broadcast %cst_205 : f32 to vector<8x1xf32>
    %196 = arith.divf %194, %195 : vector<8x1xf32>
    %cst_206 = arith.constant 5.000000e-01 : f32
    %197 = vector.broadcast %cst_206 : f32 to vector<8x1xf32>
    %198 = arith.addf %196, %197 : vector<8x1xf32>
    %cst_207 = arith.constant 0.000000e+00 : f32
    %cst_208 = arith.constant 1.000000e+00 : f32
    %199 = vector.broadcast %cst_207 : f32 to vector<8x1xf32>
    %200 = arith.maximumf %199, %198 : vector<8x1xf32>
    %201 = vector.broadcast %cst_208 : f32 to vector<8x1xf32>
    %202 = arith.minimumf %201, %200 : vector<8x1xf32>
    %c0_209 = arith.constant 0 : index
    %c0_210 = arith.constant 0 : index
    %c0_211 = arith.constant 0 : index
    %203 = vector.load %arg1[%c0_209, %c0_210, %c0_211] : memref<1x4x256xf32, #tpu.memory_space<vmem>>, vector<1x4x256xf32>
    %204 = vector.shape_cast %203 : vector<1x4x256xf32> to vector<4x256xf32>
    %c0_212 = arith.constant 0 : index
    %c0_213 = arith.constant 0 : index
    %205 = vector.load %arg13[%c0_212, %c0_213] : memref<8x4xf32, #tpu.memory_space<vmem>>, vector<8x4xf32>
    %cst_214 = arith.constant dense<0.000000e+00> : vector<8x256xf32>
    %206 = tpu.matmul %205, %204, %cst_214 {dimension_numbers = #tpu.dot_dimension_numbers<[1], [0], [0], [1], [0, 0, 1, 1], [], []>} : vector<8x4xf32>, vector<4x256xf32>, vector<8x256xf32> -> vector<8x256xf32>
    %207 = vector.broadcast %202 : vector<8x1xf32> to vector<8x256xf32>
    %208 = arith.mulf %176, %207 : vector<8x256xf32>
    %209 = arith.addf %208, %206 : vector<8x256xf32>
    %cst_215 = arith.constant 0.000000e+00 : f32
    %210 = vector.broadcast %cst_215 : f32 to vector<8x256xf32>
    %211 = arith.maximumf %209, %210 : vector<8x256xf32>
    %c0_216 = arith.constant 0 : index
    %c0_217 = arith.constant 0 : index
    %c0_218 = arith.constant 0 : index
    %212 = vector.load %arg20[%c0_216, %c0_217, %c0_218] : memref<1x8x256xf32, #tpu.memory_space<vmem>>, vector<1x8x256xf32>
    %213 = vector.shape_cast %212 : vector<1x8x256xf32> to vector<8x256xf32>
    %214 = vector.shape_cast %211 : vector<8x256xf32> to vector<1x8x256xf32>
    tpu.vector_store %arg20[%c0_216, %c0_217, %c0_218], %214 {strides = array<i32>} : memref<1x8x256xf32, #tpu.memory_space<vmem>>, vector<1x8x256xf32>,
    return
  }
  func.func @transform_0(%arg0: i32) -> (i32, i32, i32) {
    %c0_i32 = arith.constant 0 : i32
    %c0_i32_0 = arith.constant 0 : i32
    %c0_i32_1 = arith.constant 0 : i32
    return %arg0, %c0_i32, %c0_i32_0 : i32, i32, i32
  }
  func.func @transform_1(%arg0: i32) -> (i32, i32) {
    %c0_i32 = arith.constant 0 : i32
    %c0_i32_0 = arith.constant 0 : i32
    %c0_i32_1 = arith.constant 0 : i32
    return %c0_i32, %c0_i32_0 : i32, i32
  }
  func.func @transform_2(%arg0: i32) -> (i32, i32) {
    %c0_i32 = arith.constant 0 : i32
    %c0_i32_0 = arith.constant 0 : i32
    %c0_i32_1 = arith.constant 0 : i32
    return %c0_i32, %c0_i32_0 : i32, i32
  }
  func.func @transform_3(%arg0: i32) -> (i32, i32) {
    %c0_i32 = arith.constant 0 : i32
    %c0_i32_0 = arith.constant 0 : i32
    %c0_i32_1 = arith.constant 0 : i32
    return %c0_i32, %c0_i32_0 : i32, i32
  }
  func.func @transform_4(%arg0: i32) -> (i32, i32) {
    %c0_i32 = arith.constant 0 : i32
    %c0_i32_0 = arith.constant 0 : i32
    %c0_i32_1 = arith.constant 0 : i32
    return %c0_i32, %c0_i32_0 : i32, i32
  }
  func.func @transform_5(%arg0: i32) -> (i32, i32) {
    %c0_i32 = arith.constant 0 : i32
    %c0_i32_0 = arith.constant 0 : i32
    %c0_i32_1 = arith.constant 0 : i32
    return %c0_i32, %c0_i32_0 : i32, i32
  }
  func.func @transform_6(%arg0: i32) -> (i32, i32) {
    %c0_i32 = arith.constant 0 : i32
    %c0_i32_0 = arith.constant 0 : i32
    %c0_i32_1 = arith.constant 0 : i32
    return %c0_i32, %c0_i32_0 : i32, i32
  }
  func.func @transform_7(%arg0: i32) -> (i32, i32) {
    %c0_i32 = arith.constant 0 : i32
    %c0_i32_0 = arith.constant 0 : i32
    %c0_i32_1 = arith.constant 0 : i32
    return %c0_i32, %c0_i32_0 : i32, i32
  }
  func.func @transform_8(%arg0: i32) -> (i32, i32) {
    %c0_i32 = arith.constant 0 : i32
    %c0_i32_0 = arith.constant 0 : i32
    %c0_i32_1 = arith.constant 0 : i32
    return %c0_i32, %c0_i32_0 : i32, i32
  }
  func.func @transform_9(%arg0: i32) -> (i32, i32) {
    %c0_i32 = arith.constant 0 : i32
    %c0_i32_0 = arith.constant 0 : i32
    %c0_i32_1 = arith.constant 0 : i32
    return %c0_i32, %c0_i32_0 : i32, i32
  }
  func.func @transform_10(%arg0: i32) -> (i32, i32) {
    %c0_i32 = arith.constant 0 : i32
    %c0_i32_0 = arith.constant 0 : i32
    %c0_i32_1 = arith.constant 0 : i32
    return %c0_i32, %c0_i32_0 : i32, i32
  }
  func.func @transform_11(%arg0: i32) -> (i32, i32) {
    %c0_i32 = arith.constant 0 : i32
    %c0_i32_0 = arith.constant 0 : i32
    %c0_i32_1 = arith.constant 0 : i32
    return %c0_i32, %c0_i32_0 : i32, i32
  }
  func.func @transform_12(%arg0: i32) -> (i32, i32) {
    %c0_i32 = arith.constant 0 : i32
    %c0_i32_0 = arith.constant 0 : i32
    %c0_i32_1 = arith.constant 0 : i32
    return %c0_i32, %c0_i32_0 : i32, i32
  }
  func.func @transform_13(%arg0: i32) -> (i32, i32) {
    %c0_i32 = arith.constant 0 : i32
    %c0_i32_0 = arith.constant 0 : i32
    %c0_i32_1 = arith.constant 0 : i32
    return %c0_i32, %c0_i32_0 : i32, i32
  }
  func.func @transform_14(%arg0: i32) -> (i32, i32) {
    %c0_i32 = arith.constant 0 : i32
    %c0_i32_0 = arith.constant 0 : i32
    %c0_i32_1 = arith.constant 0 : i32
    return %c0_i32, %c0_i32_0 : i32, i32
  }
  func.func @transform_15(%arg0: i32) -> (i32, i32) {
    %c0_i32 = arith.constant 0 : i32
    %c0_i32_0 = arith.constant 0 : i32
    %c0_i32_1 = arith.constant 0 : i32
    return %c0_i32, %c0_i32_0 : i32, i32
  }
  func.func @transform_16(%arg0: i32) -> (i32, i32) {
    %c0_i32 = arith.constant 0 : i32
    %c0_i32_0 = arith.constant 0 : i32
    %c0_i32_1 = arith.constant 0 : i32
    return %c0_i32, %c0_i32_0 : i32, i32
  }
  func.func @transform_17(%arg0: i32) -> (i32, i32) {
    %c0_i32 = arith.constant 0 : i32
    %c0_i32_0 = arith.constant 0 : i32
    %c0_i32_1 = arith.constant 0 : i32
    return %c0_i32, %c0_i32_0 : i32, i32
  }
  func.func @transform_18(%arg0: i32) -> (i32, i32) {
    %c0_i32 = arith.constant 0 : i32
    %c0_i32_0 = arith.constant 0 : i32
    %c0_i32_1 = arith.constant 0 : i32
    return %c0_i32, %c0_i32_0 : i32, i32
  }
  func.func @transform_19(%arg0: i32) -> (i32, i32, i32) {
    %c0_i32 = arith.constant 0 : i32
    %c0_i32_0 = arith.constant 0 : i32
    %c0_i32_1 = arith.constant 0 : i32
    return %arg0, %c0_i32, %c0_i32_0 : i32, i32, i32
  }
}

</mosaic_0001>

<llo_original>
// kernel: tpu_custom_call.1
$region0: #{tpu_custom_call.1}
  #allocation0 [shape = 'u32[]', space=smem, size = 0x4, offset = 0x4, fixed_abs, tag = 'smem constant byte address 0x4 - core index']
  #allocation1 [shape = 'u32[144,128]{1,0:T(1,128)}', space=vmem, size = 0x12000, scoped, tag = 'internal scratch']
  #allocation2 [shape = 'f32[4,290]{1,0:T(4,128)}', space=vmem, size = 0x1800, scoped, tag = 'scratch operand']
  #allocation3 [shape = 'f32[8,290]{1,0:T(8,128)}', space=vmem, size = 0x3000, scoped, tag = 'scratch operand']
  #allocation4 [shape = 'f32[72,256]{1,0:T(8,128)}', space=vmem, size = 0x12000, scoped, tag = 'scratch operand']
  %s0 = inlined_call_operand.vmem [shape: f32[2,4,256], index: 0, kind: input, shape index: {}]
  %s1 = inlined_call_operand.vmem [shape: f32[9,256], index: 1, kind: input, shape index: {}]
  %s2 = inlined_call_operand.vmem [shape: f32[9,256], index: 2, kind: input, shape index: {}]
  %s3 = inlined_call_operand.vmem [shape: f32[8,72], index: 3, kind: input, shape index: {}]
  %s4 = inlined_call_operand.vmem [shape: f32[8,1], index: 4, kind: input, shape index: {}]
  %s5 = inlined_call_operand.vmem [shape: f32[8,1], index: 5, kind: input, shape index: {}]
  %s6 = inlined_call_operand.vmem [shape: f32[8,72], index: 6, kind: input, shape index: {}]
  %s7 = inlined_call_operand.vmem [shape: f32[8,1], index: 7, kind: input, shape index: {}]
  %s8 = inlined_call_operand.vmem [shape: f32[8,1], index: 8, kind: input, shape index: {}]
  %s9 = inlined_call_operand.vmem [shape: f32[8,72], index: 9, kind: input, shape index: {}]
  %s10 = inlined_call_operand.vmem [shape: f32[8,1], index: 10, kind: input, shape index: {}]
  %s11 = inlined_call_operand.vmem [shape: f32[8,1], index: 11, kind: input, shape index: {}]
  %s12 = inlined_call_operand.vmem [shape: f32[8,4], index: 12, kind: input, shape index: {}]
  %s13 = inlined_call_operand.vmem [shape: f32[2,8], index: 13, kind: input, shape index: {}]
  %s14 = inlined_call_operand.vmem [shape: f32[2,1], index: 14, kind: input, shape index: {}]
  %s15 = inlined_call_operand.vmem [shape: f32[2,1], index: 15, kind: input, shape index: {}]
  %s16 = inlined_call_operand.vmem [shape: f32[8,2], index: 16, kind: input, shape index: {}]
  %s17 = inlined_call_operand.vmem [shape: f32[8,1], index: 17, kind: input, shape index: {}]
  %s18 = inlined_call_operand.vmem [shape: f32[8,1], index: 18, kind: input, shape index: {}]
  %s19 = inlined_call_operand.hbm [shape: f32[2,8,256], index: 19, kind: output, shape index: {}]
  %s20 = sld [smem:[#allocation0]]
  $region109: #{tpu_custom_call.1} parent=0
    _
  %s22 = ssub.s32 1, %s20
  %s23 = scalar_select 0, %s22, %s20
  $region1: #{tpu_custom_call.1} parent=0
    #allocation5 [shape = 'u8[16384]{0}', space=vmem, size = 0x4000, scoped, tag = 'output window, operand 0']
    #allocation6 [shape = 's32[2]{0}', space=sflag, size = 0x8, scoped, tag = 'scoped memory for tpu_custom_call.1']
    %24 = vsyncpa [#allocation6], 0
    %s25 = scalar_lea.sflag [#allocation6], 1
    %26 = vsyncpa %s25, 0
    loop: start=0, step=1, limit=4
    $region2: #{tpu_custom_call.1} parent=1 // loop_pre_header
      _
    $region3: #{tpu_custom_call.1} parent=1 // loop_header
      %s28 = sphi 0, %s32
      %p29 = scmp.ge.s32.totalorder %s28, 4
      %s38 = sphi 0, %s40
      %s41 = sphi 0, %s38
      %s42 = sphi 0, %s41
      %s58 = sphi 0, %s42
      %s62 = sphi 0, %s62
      %s64 = sphi 0, %s62
      %s65 = sphi 0, %s64
      %s79 = sphi 0, %s65
      %s83 = sphi 0, %s83
      %s85 = sphi 0, %s83
      %s86 = sphi 0, %s85
      %s100 = sphi 0, %s86
      %s104 = sphi 0, %s104
      %s106 = sphi 0, %s104
      %s107 = sphi 0, %s106
      %s121 = sphi 0, %s107
      %s125 = sphi 0, %s125
      %s127 = sphi 0, %s125
      %s128 = sphi 0, %s127
      %s142 = sphi 0, %s128
      %s146 = sphi 0, %s146
      %s148 = sphi 0, %s146
      %s149 = sphi 0, %s148
      %s163 = sphi 0, %s149
      %s167 = sphi 0, %s167
      %s169 = sphi 0, %s167
      %s170 = sphi 0, %s169
      %s184 = sphi 0, %s170
      %s188 = sphi 0, %s188
      %s190 = sphi 0, %s188
      %s191 = sphi 0, %s190
      %s205 = sphi 0, %s191
      %s209 = sphi 0, %s209
      %s211 = sphi 0, %s209
      %s212 = sphi 0, %s211
      %s226 = sphi 0, %s212
      %s230 = sphi 0, %s230
      %s232 = sphi 0, %s230
      %s233 = sphi 0, %s232
      %s247 = sphi 0, %s233
      %s251 = sphi 0, %s251
      %s253 = sphi 0, %s251
      %s254 = sphi 0, %s253
      %s268 = sphi 0, %s254
      %s272 = sphi 0, %s272
      %s274 = sphi 0, %s272
      %s275 = sphi 0, %s274
      %s289 = sphi 0, %s275
      %s293 = sphi 0, %s293
      %s295 = sphi 0, %s293
      %s296 = sphi 0, %s295
      %s310 = sphi 0, %s296
      %s314 = sphi 0, %s314
      %s316 = sphi 0, %s314
      %s317 = sphi 0, %s316
      %s331 = sphi 0, %s317
      %s335 = sphi 0, %s335
      %s337 = sphi 0, %s335
      %s338 = sphi 0, %s337
      %s352 = sphi 0, %s338
      %s356 = sphi 0, %s356
      %s358 = sphi 0, %s356
      %s359 = sphi 0, %s358
      %s373 = sphi 0, %s359
      %s377 = sphi 0, %s377
      %s379 = sphi 0, %s377
      %s380 = sphi 0, %s379
      %s394 = sphi 0, %s380
      %s398 = sphi 0, %s398
      %s400 = sphi 0, %s398
      %s401 = sphi 0, %s400
      %s415 = sphi 0, %s401
      %s419 = sphi 0, %s419
      %s421 = sphi 0, %s419
      %s422 = sphi 0, %s421
      %s436 = sphi 0, %s422
      %s442 = sphi 0, %s444
      %s445 = sphi 0, %s442
      %s446 = sphi 0, %s445
      %s462 = sphi 0, %s446
    $region4: #{tpu_custom_call.1} parent=1 // loop_header_branch
      %31 = sbr.rel (%p29) target = $region8
    $region5: #{tpu_custom_call.1} parent=1 // loop_body
      %s33 = ssub.s32 %s28, 1
      %s34 = ssub.s32 %s28, 2
      %s35 = sadd.s32 %s28, 1
      %s36 = ssub.s32 %s28, %s35
      %p37 = scmp.eq.s32.totalorder %s36, 0
      %s39 = sadd.s32 %s38, 1
      %s40 = scalar_select %p37, %s38, %s39
      %p43 = pneg %p37
      %p44 = scmp.eq.s32.totalorder %s28, 1
      %p45 = por %p43, %p44
      %p46 = scmp.ne.s32.totalorder %s38, %s41
      %p47 = scmp.eq.s32.totalorder %s28, 0
      %p48 = por %p46, %p47
      %p49 = scmp.ne.s32.totalorder %s38, %s41
      %p50 = scmp.eq.s32.totalorder %s33, 1
      %p51 = por %p49, %p50
      %p52 = scmp.ne.s32.totalorder %s41, %s42
      %p53 = scmp.eq.s32.totalorder %s33, 0
      %p54 = por %p52, %p53
      %p55 = scmp.ne.s32.totalorder %s41, %s42
      %p56 = scmp.eq.s32.totalorder %s34, 1
      %p57 = por %p55, %p56
      %p59 = scmp.ne.s32.totalorder %s42, %s58
      %p60 = scmp.eq.s32.totalorder %s34, 0
      %p61 = por %p59, %p60
      %s63 = sadd.s32 %s62, 1
      %p66 = scmp.eq.s32.totalorder %s28, 1
      %p67 = scmp.ne.s32.totalorder %s62, %s64
      %p68 = scmp.eq.s32.totalorder %s28, 0
      %p69 = por %p67, %p68
      %p70 = scmp.ne.s32.totalorder %s62, %s64
      %p71 = scmp.eq.s32.totalorder %s33, 1
      %p72 = por %p70, %p71
      %p73 = scmp.ne.s32.totalorder %s64, %s65
      %p74 = scmp.eq.s32.totalorder %s33, 0
      %p75 = por %p73, %p74
      %p76 = scmp.ne.s32.totalorder %s64, %s65
      %p77 = scmp.eq.s32.totalorder %s34, 1
      %p78 = por %p76, %p77
      %p80 = scmp.ne.s32.totalorder %s65, %s79
      %p81 = scmp.eq.s32.totalorder %s34, 0
      %p82 = por %p80, %p81
      %s84 = sadd.s32 %s83, 1
      %p87 = scmp.eq.s32.totalorder %s28, 1
      %p88 = scmp.ne.s32.totalorder %s83, %s85
      %p89 = scmp.eq.s32.totalorder %s28, 0
      %p90 = por %p88, %p89
      %p91 = scmp.ne.s32.totalorder %s83, %s85
      %p92 = scmp.eq.s32.totalorder %s33, 1
      %p93 = por %p91, %p92
      %p94 = scmp.ne.s32.totalorder %s85, %s86
      %p95 = scmp.eq.s32.totalorder %s33, 0
      %p96 = por %p94, %p95
      %p97 = scmp.ne.s32.totalorder %s85, %s86
      %p98 = scmp.eq.s32.totalorder %s34, 1
      %p99 = por %p97, %p98
      %p101 = scmp.ne.s32.totalorder %s86, %s100
      %p102 = scmp.eq.s32.totalorder %s34, 0
      %p103 = por %p101, %p102
      %s105 = sadd.s32 %s104, 1
      %p108 = scmp.eq.s32.totalorder %s28, 1
      %p109 = scmp.ne.s32.totalorder %s104, %s106
      %p110 = scmp.eq.s32.totalorder %s28, 0
      %p111 = por %p109, %p110
      %p112 = scmp.ne.s32.totalorder %s104, %s106
      %p113 = scmp.eq.s32.totalorder %s33, 1
      %p114 = por %p112, %p113
      %p115 = scmp.ne.s32.totalorder %s106, %s107
      %p116 = scmp.eq.s32.totalorder %s33, 0
      %p117 = por %p115, %p116
      %p118 = scmp.ne.s32.totalorder %s106, %s107
      %p119 = scmp.eq.s32.totalorder %s34, 1
      %p120 = por %p118, %p119
      %p122 = scmp.ne.s32.totalorder %s107, %s121
      %p123 = scmp.eq.s32.totalorder %s34, 0
      %p124 = por %p122, %p123
      %s126 = sadd.s32 %s125, 1
      %p129 = scmp.eq.s32.totalorder %s28, 1
      %p130 = scmp.ne.s32.totalorder %s125, %s127
      %p131 = scmp.eq.s32.totalorder %s28, 0
      %p132 = por %p130, %p131
      %p133 = scmp.ne.s32.totalorder %s125, %s127
      %p134 = scmp.eq.s32.totalorder %s33, 1
      %p135 = por %p133, %p134
      %p136 = scmp.ne.s32.totalorder %s127, %s128
      %p137 = scmp.eq.s32.totalorder %s33, 0
      %p138 = por %p136, %p137
      %p139 = scmp.ne.s32.totalorder %s127, %s128
      %p140 = scmp.eq.s32.totalorder %s34, 1
      %p141 = por %p139, %p140
      %p143 = scmp.ne.s32.totalorder %s128, %s142
      %p144 = scmp.eq.s32.totalorder %s34, 0
      %p145 = por %p143, %p144
      %s147 = sadd.s32 %s146, 1
      %p150 = scmp.eq.s32.totalorder %s28, 1
      %p151 = scmp.ne.s32.totalorder %s146, %s148
      %p152 = scmp.eq.s32.totalorder %s28, 0
      %p153 = por %p151, %p152
      %p154 = scmp.ne.s32.totalorder %s146, %s148
      %p155 = scmp.eq.s32.totalorder %s33, 1
      %p156 = por %p154, %p155
      %p157 = scmp.ne.s32.totalorder %s148, %s149
      %p158 = scmp.eq.s32.totalorder %s33, 0
      %p159 = por %p157, %p158
      %p160 = scmp.ne.s32.totalorder %s148, %s149
      %p161 = scmp.eq.s32.totalorder %s34, 1
      %p162 = por %p160, %p161
      %p164 = scmp.ne.s32.totalorder %s149, %s163
      %p165 = scmp.eq.s32.totalorder %s34, 0
      %p166 = por %p164, %p165
      %s168 = sadd.s32 %s167, 1
      %p171 = scmp.eq.s32.totalorder %s28, 1
      %p172 = scmp.ne.s32.totalorder %s167, %s169
      %p173 = scmp.eq.s32.totalorder %s28, 0
      %p174 = por %p172, %p173
      %p175 = scmp.ne.s32.totalorder %s167, %s169
      %p176 = scmp.eq.s32.totalorder %s33, 1
      %p177 = por %p175, %p176
      %p178 = scmp.ne.s32.totalorder %s169, %s170
      %p179 = scmp.eq.s32.totalorder %s33, 0
      %p180 = por %p178, %p179
      %p181 = scmp.ne.s32.totalorder %s169, %s170
      %p182 = scmp.eq.s32.totalorder %s34, 1
      %p183 = por %p181, %p182
      %p185 = scmp.ne.s32.totalorder %s170, %s184
      %p186 = scmp.eq.s32.totalorder %s34, 0
      %p187 = por %p185, %p186
      %s189 = sadd.s32 %s188, 1
      %p192 = scmp.eq.s32.totalorder %s28, 1
      %p193 = scmp.ne.s32.totalorder %s188, %s190
      %p194 = scmp.eq.s32.totalorder %s28, 0
      %p195 = por %p193, %p194
      %p196 = scmp.ne.s32.totalorder %s188, %s190
      %p197 = scmp.eq.s32.totalorder %s33, 1
      %p198 = por %p196, %p197
      %p199 = scmp.ne.s32.totalorder %s190, %s191
      %p200 = scmp.eq.s32.totalorder %s33, 0
      %p201 = por %p199, %p200
      %p202 = scmp.ne.s32.totalorder %s190, %s191
      %p203 = scmp.eq.s32.totalorder %s34, 1
      %p204 = por %p202, %p203
      %p206 = scmp.ne.s32.totalorder %s191, %s205
      %p207 = scmp.eq.s32.totalorder %s34, 0
      %p208 = por %p206, %p207
      %s210 = sadd.s32 %s209, 1
      %p213 = scmp.eq.s32.totalorder %s28, 1
      %p214 = scmp.ne.s32.totalorder %s209, %s211
      %p215 = scmp.eq.s32.totalorder %s28, 0
      %p216 = por %p214, %p215
      %p217 = scmp.ne.s32.totalorder %s209, %s211
      %p218 = scmp.eq.s32.totalorder %s33, 1
      %p219 = por %p217, %p218
      %p220 = scmp.ne.s32.totalorder %s211, %s212
      %p221 = scmp.eq.s32.totalorder %s33, 0
      %p222 = por %p220, %p221
      %p223 = scmp.ne.s32.totalorder %s211, %s212
      %p224 = scmp.eq.s32.totalorder %s34, 1
      %p225 = por %p223, %p224
      %p227 = scmp.ne.s32.totalorder %s212, %s226
      %p228 = scmp.eq.s32.totalorder %s34, 0
      %p229 = por %p227, %p228
      %s231 = sadd.s32 %s230, 1
      %p234 = scmp.eq.s32.totalorder %s28, 1
      %p235 = scmp.ne.s32.totalorder %s230, %s232
      %p236 = scmp.eq.s32.totalorder %s28, 0
      %p237 = por %p235, %p236
      %p238 = scmp.ne.s32.totalorder %s230, %s232
      %p239 = scmp.eq.s32.totalorder %s33, 1
      %p240 = por %p238, %p239
      %p241 = scmp.ne.s32.totalorder %s232, %s233
      %p242 = scmp.eq.s32.totalorder %s33, 0
      %p243 = por %p241, %p242
      %p244 = scmp.ne.s32.totalorder %s232, %s233
      %p245 = scmp.eq.s32.totalorder %s34, 1
      %p246 = por %p244, %p245
      %p248 = scmp.ne.s32.totalorder %s233, %s247
      %p249 = scmp.eq.s32.totalorder %s34, 0
      %p250 = por %p248, %p249
      %s252 = sadd.s32 %s251, 1
      %p255 = scmp.eq.s32.totalorder %s28, 1
      %p256 = scmp.ne.s32.totalorder %s251, %s253
      %p257 = scmp.eq.s32.totalorder %s28, 0
      %p258 = por %p256, %p257
      %p259 = scmp.ne.s32.totalorder %s251, %s253
      %p260 = scmp.eq.s32.totalorder %s33, 1
      %p261 = por %p259, %p260
      %p262 = scmp.ne.s32.totalorder %s253, %s254
      %p263 = scmp.eq.s32.totalorder %s33, 0
      %p264 = por %p262, %p263
      %p265 = scmp.ne.s32.totalorder %s253, %s254
      %p266 = scmp.eq.s32.totalorder %s34, 1
      %p267 = por %p265, %p266
      %p269 = scmp.ne.s32.totalorder %s254, %s268
      %p270 = scmp.eq.s32.totalorder %s34, 0
      %p271 = por %p269, %p270
      %s273 = sadd.s32 %s272, 1
      %p276 = scmp.eq.s32.totalorder %s28, 1
      %p277 = scmp.ne.s32.totalorder %s272, %s274
      %p278 = scmp.eq.s32.totalorder %s28, 0
      %p279 = por %p277, %p278
      %p280 = scmp.ne.s32.totalorder %s272, %s274
      %p281 = scmp.eq.s32.totalorder %s33, 1
      %p282 = por %p280, %p281
      %p283 = scmp.ne.s32.totalorder %s274, %s275
      %p284 = scmp.eq.s32.totalorder %s33, 0
      %p285 = por %p283, %p284
      %p286 = scmp.ne.s32.totalorder %s274, %s275
      %p287 = scmp.eq.s32.totalorder %s34, 1
      %p288 = por %p286, %p287
      %p290 = scmp.ne.s32.totalorder %s275, %s289
      %p291 = scmp.eq.s32.totalorder %s34, 0
      %p292 = por %p290, %p291
      %s294 = sadd.s32 %s293, 1
      %p297 = scmp.eq.s32.totalorder %s28, 1
      %p298 = scmp.ne.s32.totalorder %s293, %s295
      %p299 = scmp.eq.s32.totalorder %s28, 0
      %p300 = por %p298, %p299
      %p301 = scmp.ne.s32.totalorder %s293, %s295
      %p302 = scmp.eq.s32.totalorder %s33, 1
      %p303 = por %p301, %p302
      %p304 = scmp.ne.s32.totalorder %s295, %s296
      %p305 = scmp.eq.s32.totalorder %s33, 0
      %p306 = por %p304, %p305
      %p307 = scmp.ne.s32.totalorder %s295, %s296
      %p308 = scmp.eq.s32.totalorder %s34, 1
      %p309 = por %p307, %p308
      %p311 = scmp.ne.s32.totalorder %s296, %s310
      %p312 = scmp.eq.s32.totalorder %s34, 0
      %p313 = por %p311, %p312
      %s315 = sadd.s32 %s314, 1
      %p318 = scmp.eq.s32.totalorder %s28, 1
      %p319 = scmp.ne.s32.totalorder %s314, %s316
      %p320 = scmp.eq.s32.totalorder %s28, 0
      %p321 = por %p319, %p320
      %p322 = scmp.ne.s32.totalorder %s314, %s316
      %p323 = scmp.eq.s32.totalorder %s33, 1
      %p324 = por %p322, %p323
      %p325 = scmp.ne.s32.totalorder %s316, %s317
      %p326 = scmp.eq.s32.totalorder %s33, 0
      %p327 = por %p325, %p326
      %p328 = scmp.ne.s32.totalorder %s316, %s317
      %p329 = scmp.eq.s32.totalorder %s34, 1
      %p330 = por %p328, %p329
      %p332 = scmp.ne.s32.totalorder %s317, %s331
      %p333 = scmp.eq.s32.totalorder %s34, 0
      %p334 = por %p332, %p333
      %s336 = sadd.s32 %s335, 1
      %p339 = scmp.eq.s32.totalorder %s28, 1
      %p340 = scmp.ne.s32.totalorder %s335, %s337
      %p341 = scmp.eq.s32.totalorder %s28, 0
      %p342 = por %p340, %p341
      %p343 = scmp.ne.s32.totalorder %s335, %s337
      %p344 = scmp.eq.s32.totalorder %s33, 1
      %p345 = por %p343, %p344
      %p346 = scmp.ne.s32.totalorder %s337, %s338
      %p347 = scmp.eq.s32.totalorder %s33, 0
      %p348 = por %p346, %p347
      %p349 = scmp.ne.s32.totalorder %s337, %s338
      %p350 = scmp.eq.s32.totalorder %s34, 1
      %p351 = por %p349, %p350
      %p353 = scmp.ne.s32.totalorder %s338, %s352
      %p354 = scmp.eq.s32.totalorder %s34, 0
      %p355 = por %p353, %p354
      %s357 = sadd.s32 %s356, 1
      %p360 = scmp.eq.s32.totalorder %s28, 1
      %p361 = scmp.ne.s32.totalorder %s356, %s358
      %p362 = scmp.eq.s32.totalorder %s28, 0
      %p363 = por %p361, %p362
      %p364 = scmp.ne.s32.totalorder %s356, %s358
      %p365 = scmp.eq.s32.totalorder %s33, 1
      %p366 = por %p364, %p365
      %p367 = scmp.ne.s32.totalorder %s358, %s359
      %p368 = scmp.eq.s32.totalorder %s33, 0
      %p369 = por %p367, %p368
      %p370 = scmp.ne.s32.totalorder %s358, %s359
      %p371 = scmp.eq.s32.totalorder %s34, 1
      %p372 = por %p370, %p371
      %p374 = scmp.ne.s32.totalorder %s359, %s373
      %p375 = scmp.eq.s32.totalorder %s34, 0
      %p376 = por %p374, %p375
      %s378 = sadd.s32 %s377, 1
      %p381 = scmp.eq.s32.totalorder %s28, 1
      %p382 = scmp.ne.s32.totalorder %s377, %s379
      %p383 = scmp.eq.s32.totalorder %s28, 0
      %p384 = por %p382, %p383
      %p385 = scmp.ne.s32.totalorder %s377, %s379
      %p386 = scmp.eq.s32.totalorder %s33, 1
      %p387 = por %p385, %p386
      %p388 = scmp.ne.s32.totalorder %s379, %s380
      %p389 = scmp.eq.s32.totalorder %s33, 0
      %p390 = por %p388, %p389
      %p391 = scmp.ne.s32.totalorder %s379, %s380
      %p392 = scmp.eq.s32.totalorder %s34, 1
      %p393 = por %p391, %p392
      %p395 = scmp.ne.s32.totalorder %s380, %s394
      %p396 = scmp.eq.s32.totalorder %s34, 0
      %p397 = por %p395, %p396
      %s399 = sadd.s32 %s398, 1
      %p402 = scmp.eq.s32.totalorder %s28, 1
      %p403 = scmp.ne.s32.totalorder %s398, %s400
      %p404 = scmp.eq.s32.totalorder %s28, 0
      %p405 = por %p403, %p404
      %p406 = scmp.ne.s32.totalorder %s398, %s400
      %p407 = scmp.eq.s32.totalorder %s33, 1
      %p408 = por %p406, %p407
      %p409 = scmp.ne.s32.totalorder %s400, %s401
      %p410 = scmp.eq.s32.totalorder %s33, 0
      %p411 = por %p409, %p410
      %p412 = scmp.ne.s32.totalorder %s400, %s401
      %p413 = scmp.eq.s32.totalorder %s34, 1
      %p414 = por %p412, %p413
      %p416 = scmp.ne.s32.totalorder %s401, %s415
      %p417 = scmp.eq.s32.totalorder %s34, 0
      %p418 = por %p416, %p417
      %s420 = sadd.s32 %s419, 1
      %p423 = scmp.eq.s32.totalorder %s28, 1
      %p424 = scmp.ne.s32.totalorder %s419, %s421
      %p425 = scmp.eq.s32.totalorder %s28, 0
      %p426 = por %p424, %p425
      %p427 = scmp.ne.s32.totalorder %s419, %s421
      %p428 = scmp.eq.s32.totalorder %s33, 1
      %p429 = por %p427, %p428
      %p430 = scmp.ne.s32.totalorder %s421, %s422
      %p431 = scmp.eq.s32.totalorder %s33, 0
      %p432 = por %p430, %p431
      %p433 = scmp.ne.s32.totalorder %s421, %s422
      %p434 = scmp.eq.s32.totalorder %s34, 1
      %p435 = por %p433, %p434
      %p437 = scmp.ne.s32.totalorder %s422, %s436
      %p438 = scmp.eq.s32.totalorder %s34, 0
      %p439 = por %p437, %p438
      %s440 = ssub.s32 %s28, %s35
      %p441 = scmp.eq.s32.totalorder %s440, 0
      %s443 = sadd.s32 %s442, 1
      %s444 = scalar_select %p441, %s442, %s443
      %p447 = pneg %p441
      %p448 = scmp.eq.s32.totalorder %s28, 1
      %p449 = por %p447, %p448
      %p450 = scmp.ne.s32.totalorder %s442, %s445
      %p451 = scmp.eq.s32.totalorder %s28, 0
      %p452 = por %p450, %p451
      %p453 = scmp.ne.s32.totalorder %s442, %s445
      %p454 = scmp.eq.s32.totalorder %s33, 1
      %p455 = por %p453, %p454
      %p456 = scmp.ne.s32.totalorder %s445, %s446
      %p457 = scmp.eq.s32.totalorder %s33, 0
      %p458 = por %p456, %p457
      %p459 = scmp.ne.s32.totalorder %s445, %s446
      %p460 = scmp.eq.s32.totalorder %s34, 1
      %p461 = por %p459, %p460
      %p463 = scmp.ne.s32.totalorder %s446, %s462
      %p464 = scmp.eq.s32.totalorder %s34, 0
      %p465 = por %p463, %p464
      %p466 = scmp.le.s32.totalorder 1, %s28
      %p467 = scmp.lt.s32.totalorder %s28, 3
      %p468 = pnand %p466, %p467
      %p469 = pneg %p468
      // Predicated region
      $region9: #{tpu_custom_call.1} parent=5 // pred_check
        _
      $region10: #{tpu_custom_call.1} parent=5 // pred_check_branch
        %471 = sbr.rel (%p468) target = $region12
      $region11: #{tpu_custom_call.1} parent=5 // pred_region
        %s472 = ssub.s32 %s28, 1
        // Predicated region
        $region13: #{tpu_custom_call.1} parent=11 // pred_check
          %p473 = pneg %p75
        $region14: #{tpu_custom_call.1} parent=11 // pred_check_branch
          %475 = sbr.rel (%p473) target = $region16
        $region15: #{tpu_custom_call.1} parent=11 // pred_region
          _
        $region16: #{tpu_custom_call.1} parent=11 // pred_fallthru
          _
        // Predicated region
        $region17: #{tpu_custom_call.1} parent=11 // pred_check
          %p476 = pneg %p96
        $region18: #{tpu_custom_call.1} parent=11 // pred_check_branch
          %478 = sbr.rel (%p476) target = $region20
        $region19: #{tpu_custom_call.1} parent=11 // pred_region
          _
        $region20: #{tpu_custom_call.1} parent=11 // pred_fallthru
          _
        // Predicated region
        $region21: #{tpu_custom_call.1} parent=11 // pred_check
          %p479 = pneg %p117
        $region22: #{tpu_custom_call.1} parent=11 // pred_check_branch
          %481 = sbr.rel (%p479) target = $region24
        $region23: #{tpu_custom_call.1} parent=11 // pred_region
          _
        $region24: #{tpu_custom_call.1} parent=11 // pred_fallthru
          _
        // Predicated region
        $region25: #{tpu_custom_call.1} parent=11 // pred_check
          %p482 = pneg %p138
        $region26: #{tpu_custom_call.1} parent=11 // pred_check_branch
          %484 = sbr.rel (%p482) target = $region28
        $region27: #{tpu_custom_call.1} parent=11 // pred_region
          _
        $region28: #{tpu_custom_call.1} parent=11 // pred_fallthru
          _
        // Predicated region
        $region29: #{tpu_custom_call.1} parent=11 // pred_check
          %p485 = pneg %p159
        $region30: #{tpu_custom_call.1} parent=11 // pred_check_branch
          %487 = sbr.rel (%p485) target = $region32
        $region31: #{tpu_custom_call.1} parent=11 // pred_region
          _
        $region32: #{tpu_custom_call.1} parent=11 // pred_fallthru
          _
        // Predicated region
        $region33: #{tpu_custom_call.1} parent=11 // pred_check
          %p488 = pneg %p180
        $region34: #{tpu_custom_call.1} parent=11 // pred_check_branch
          %490 = sbr.rel (%p488) target = $region36
        $region35: #{tpu_custom_call.1} parent=11 // pred_region
          _
        $region36: #{tpu_custom_call.1} parent=11 // pred_fallthru
          _
        // Predicated region
        $region37: #{tpu_custom_call.1} parent=11 // pred_check
          %p491 = pneg %p201
        $region38: #{tpu_custom_call.1} parent=11 // pred_check_branch
          %493 = sbr.rel (%p491) target = $region40
        $region39: #{tpu_custom_call.1} parent=11 // pred_region
          _
        $region40: #{tpu_custom_call.1} parent=11 // pred_fallthru
          _
        // Predicated region
        $region41: #{tpu_custom_call.1} parent=11 // pred_check
          %p494 = pneg %p222
        $region42: #{tpu_custom_call.1} parent=11 // pred_check_branch
          %496 = sbr.rel (%p494) target = $region44
        $region43: #{tpu_custom_call.1} parent=11 // pred_region
          _
        $region44: #{tpu_custom_call.1} parent=11 // pred_fallthru
          _
        // Predicated region
        $region45: #{tpu_custom_call.1} parent=11 // pred_check
          %p497 = pneg %p243
        $region46: #{tpu_custom_call.1} parent=11 // pred_check_branch
          %499 = sbr.rel (%p497) target = $region48
        $region47: #{tpu_custom_call.1} parent=11 // pred_region
          _
        $region48: #{tpu_custom_call.1} parent=11 // pred_fallthru
          _
        // Predicated region
        $region49: #{tpu_custom_call.1} parent=11 // pred_check
          %p500 = pneg %p264
        $region50: #{tpu_custom_call.1} parent=11 // pred_check_branch
          %502 = sbr.rel (%p500) target = $region52
        $region51: #{tpu_custom_call.1} parent=11 // pred_region
          _
        $region52: #{tpu_custom_call.1} parent=11 // pred_fallthru
          _
        // Predicated region
        $region53: #{tpu_custom_call.1} parent=11 // pred_check
          %p503 = pneg %p285
        $region54: #{tpu_custom_call.1} parent=11 // pred_check_branch
          %505 = sbr.rel (%p503) target = $region56
        $region55: #{tpu_custom_call.1} parent=11 // pred_region
          _
        $region56: #{tpu_custom_call.1} parent=11 // pred_fallthru
          _
        // Predicated region
        $region57: #{tpu_custom_call.1} parent=11 // pred_check
          %p506 = pneg %p306
        $region58: #{tpu_custom_call.1} parent=11 // pred_check_branch
          %508 = sbr.rel (%p506) target = $region60
        $region59: #{tpu_custom_call.1} parent=11 // pred_region
          _
        $region60: #{tpu_custom_call.1} parent=11 // pred_fallthru
          _
        // Predicated region
        $region61: #{tpu_custom_call.1} parent=11 // pred_check
          %p509 = pneg %p327
        $region62: #{tpu_custom_call.1} parent=11 // pred_check_branch
          %511 = sbr.rel (%p509) target = $region64
        $region63: #{tpu_custom_call.1} parent=11 // pred_region
          _
        $region64: #{tpu_custom_call.1} parent=11 // pred_fallthru
          _
        // Predicated region
        $region65: #{tpu_custom_call.1} parent=11 // pred_check
          %p512 = pneg %p348
        $region66: #{tpu_custom_call.1} parent=11 // pred_check_branch
          %514 = sbr.rel (%p512) target = $region68
        $region67: #{tpu_custom_call.1} parent=11 // pred_region
          _
        $region68: #{tpu_custom_call.1} parent=11 // pred_fallthru
          _
        // Predicated region
        $region69: #{tpu_custom_call.1} parent=11 // pred_check
          %p515 = pneg %p369
        $region70: #{tpu_custom_call.1} parent=11 // pred_check_branch
          %517 = sbr.rel (%p515) target = $region72
        $region71: #{tpu_custom_call.1} parent=11 // pred_region
          _
        $region72: #{tpu_custom_call.1} parent=11 // pred_fallthru
          _
        // Predicated region
        $region73: #{tpu_custom_call.1} parent=11 // pred_check
          %p518 = pneg %p390
        $region74: #{tpu_custom_call.1} parent=11 // pred_check_branch
          %520 = sbr.rel (%p518) target = $region76
        $region75: #{tpu_custom_call.1} parent=11 // pred_region
          _
        $region76: #{tpu_custom_call.1} parent=11 // pred_fallthru
          _
        // Predicated region
        $region77: #{tpu_custom_call.1} parent=11 // pred_check
          %p521 = pneg %p411
        $region78: #{tpu_custom_call.1} parent=11 // pred_check_branch
          %523 = sbr.rel (%p521) target = $region80
        $region79: #{tpu_custom_call.1} parent=11 // pred_region
          _
        $region80: #{tpu_custom_call.1} parent=11 // pred_fallthru
          _
        // Predicated region
        $region81: #{tpu_custom_call.1} parent=11 // pred_check
          %p524 = pneg %p432
        $region82: #{tpu_custom_call.1} parent=11 // pred_check_branch
          %526 = sbr.rel (%p524) target = $region84
        $region83: #{tpu_custom_call.1} parent=11 // pred_region
          _
        $region84: #{tpu_custom_call.1} parent=11 // pred_fallthru
          _
      $region12: #{tpu_custom_call.1} parent=5 // pred_fallthru
        _
      %p527 = scmp.lt.s32.totalorder %s28, 2
      // Predicated region
      $region85: #{tpu_custom_call.1} parent=5 // pred_check
        %p528 = pneg %p527
      $region86: #{tpu_custom_call.1} parent=5 // pred_check_branch
        %530 = sbr.rel (%p528) target = $region88
      $region87: #{tpu_custom_call.1} parent=5 // pred_region
        // Predicated region
        $region89: #{tpu_custom_call.1} parent=87 // pred_check
          %p531 = pneg %p48
        $region90: #{tpu_custom_call.1} parent=87 // pred_check_branch
          %533 = sbr.rel (%p531) target = $region92
        $region91: #{tpu_custom_call.1} parent=87 // pred_region
          %p534 = scmp.lt.s32.totalorder %s28, 1
          %s535 = scalar_select %p534, %s28, 1
          %s536 = smul.addr %s535, 2
          %s537 = smul.addr %s536, 4
          %s538 = scalar_lea.vmem %s0, %s537
        $region92: #{tpu_custom_call.1} parent=87 // pred_fallthru
          _
      $region88: #{tpu_custom_call.1} parent=5 // pred_fallthru
        _
      %p539 = scmp.le.s32.totalorder 1, %s28
      %p540 = scmp.lt.s32.totalorder %s28, 3
      %p541 = pnand %p539, %p540
      %p542 = pneg %p541
      // Predicated region
      $region93: #{tpu_custom_call.1} parent=5 // pred_check
        _
      $region94: #{tpu_custom_call.1} parent=5 // pred_check_branch
        %544 = sbr.rel (%p541) target = $region96
      $region95: #{tpu_custom_call.1} parent=5 // pred_region
        %s545 = ssub.s32 %s28, 1
        %p546 = scmp.lt.s32.totalorder %s33, 1
        %s547 = scalar_select %p546, %s33, 1
        %s548 = smul.addr %s547, 2
        %s549 = smul.addr %s548, 4
        %s550 = scalar_lea.vmem %s0, %s549
        %p551 = pneg %p54
        %p552 = pneg %p51
        %p553 = pneg %p75
        %p554 = pneg %p72
        %p555 = pneg %p96
        %p556 = pneg %p93
        %p557 = pneg %p117
        %p558 = pneg %p114
        %p559 = pneg %p138
        %p560 = pneg %p135
        %p561 = pneg %p159
        %p562 = pneg %p156
        %p563 = pneg %p180
        %p564 = pneg %p177
        %p565 = pneg %p201
        %p566 = pneg %p198
        %p567 = pneg %p222
        %p568 = pneg %p219
        %p569 = pneg %p243
        %p570 = pneg %p240
        %p571 = pneg %p264
        %p572 = pneg %p261
        %p573 = pneg %p285
        %p574 = pneg %p282
        %p575 = pneg %p306
        %p576 = pneg %p303
        %p577 = pneg %p327
        %p578 = pneg %p324
        %p579 = pneg %p348
        %p580 = pneg %p345
        %p581 = pneg %p369
        %p582 = pneg %p366
        %p583 = pneg %p390
        %p584 = pneg %p387
        %p585 = pneg %p411
        %p586 = pneg %p408
        %p587 = pneg %p432
        %p588 = pneg %p429
        %p589 = pneg %p458
        %p590 = pneg %p455
        %s591 = sand.u32 %s445, 1
        %s592 = scalar_lea.sflag [#allocation6], %s591
        %s593 = sand.u32 %s445, 1
        %s594 = smul.addr %s593, 16
        %s595 = scalar_lea.vmem [#allocation5], %s594
        %p596 = scmp.lt.s32.totalorder %s33, 1
        %s597 = scalar_select %p596, %s33, 1
        %s598 = smul.addr %s597, 2
        %s599 = smul.addr %s598, 4
        %s600 = scalar_lea.vmem %s0, %s599
        %601 = vst [vmem:[#allocation2] sm:$0xff] 0.0
        %vm602 = vcmask 273408
        %603 = vst.msk [vmem:[#allocation2 + $0x8] sm:$0xf] %vm602, 0.0
        %604 = vst [vmem:[#allocation3] sm:$0xff] 0.0
        %605 = vst [vmem:[#allocation3 + $0x8] sm:$0xff] 0.0
        %vm606 = vcmask 277504
        %607 = vst.msk [vmem:[#allocation3 + $0x10] sm:$0xff] %vm606, 0.0
        %608 = vst [vmem:[#allocation4] sm:$0xff] 0.0
        %609 = vst [vmem:[#allocation4 + $0x8] sm:$0xff] 0.0
        %610 = vst [vmem:[#allocation4 + $0x10] sm:$0xff] 0.0
        %611 = vst [vmem:[#allocation4 + $0x18] sm:$0xff] 0.0
        %612 = vst [vmem:[#allocation4 + $0x20] sm:$0xff] 0.0
        %613 = vst [vmem:[#allocation4 + $0x28] sm:$0xff] 0.0
        %614 = vst [vmem:[#allocation4 + $0x30] sm:$0xff] 0.0
        %615 = vst [vmem:[#allocation4 + $0x38] sm:$0xff] 0.0
        %616 = vst [vmem:[#allocation4 + $0x40] sm:$0xff] 0.0
        %617 = vst [vmem:[#allocation4 + $0x48] sm:$0xff] 0.0
        %618 = vst [vmem:[#allocation4 + $0x50] sm:$0xff] 0.0
        %619 = vst [vmem:[#allocation4 + $0x58] sm:$0xff] 0.0
        %620 = vst [vmem:[#allocation4 + $0x60] sm:$0xff] 0.0
        %621 = vst [vmem:[#allocation4 + $0x68] sm:$0xff] 0.0
        %622 = vst [vmem:[#allocation4 + $0x70] sm:$0xff] 0.0
        %623 = vst [vmem:[#allocation4 + $0x78] sm:$0xff] 0.0
        %624 = vst [vmem:[#allocation4 + $0x80] sm:$0xff] 0.0
        %625 = vst [vmem:[#allocation4 + $0x88] sm:$0xff] 0.0
        %v626 = vld [vmem:[%s600] sm:$0xff]
        %628 = vrot.lane.b32.xlu0 %v626, 17
        %v629 = vpop.permute.xlu0 %628
        %v630 = vrot.slane %v629, 4
        %vm631 = vcmask 138240
        %v632 = vsel %vm631, %v630, %v629
        %vm635 = vcmask 1043592
        %vm636 = vcmask 1047556
        %vm637 = vmor %vm636, %vm635
        %638 = vst.msk [vmem:[#allocation2] sm:$0xff] %vm637, %v632
        %vm639 = vcmask 134144
        %640 = vst.msk [vmem:[#allocation2 + $0x8] sm:$0xf] %vm639, %v630
        %v641 = vld [vmem:[#allocation2] sm:$0xff]
        %v642 = vld [vmem:[%s1] ss:$8 sm:$0x3]
        %v644 = vlaneseq
        %v645 = vshrl.u32 %v644, 7
        %v646 = vsub.s32 0, %v645
        %v647 = vrot.slane %v642, %v646
        %v648 = vlaneseq
        %v649 = vshrl.u32 %v648, 7
        %v650 = vsub.s32 1, %v649
        %v651 = vrot.slane %v642, %v650
        %v652 = vcombine.low %v647, %v651
        %v654 = vmul.f32 %v641, %v652
        %v656 = vcombine.high %v654, %v654
        %658 = vst [vmem:[#allocation4] sm:$0xf] %v654
        %659 = vst [vmem:[#allocation4 + $0x8] sm:$0xf] %v656
        %v660 = vld [vmem:[#allocation2] sm:$0xff]
        %v661 = vld [vmem:[#allocation2 + $0x8] sm:$0xf]
        %s662 = scalar_lea.vmem %s1, 1
        %v663 = vld [vmem:[%s662] ss:$8 sm:$0x3]
        %v665 = vlaneseq
        %v666 = vshrl.u32 %v665, 7
        %v667 = vsub.s32 0, %v666
        %v668 = vrot.slane %v663, %v667
        %v669 = vlaneseq
        %v670 = vshrl.u32 %v669, 7
        %v671 = vsub.s32 1, %v670
        %v672 = vrot.slane %v663, %v671
        %v673 = vcombine.low %v668, %v672
        %674 = vrot.lane.b32.xlu0 %v673, 1
        %v675 = vpop.permute.xlu0 %674
        %v676 = vrot.slane %v675, 4
        %vm677 = vcmask 7168
        %v678 = vsel %vm677, %v676, %v675
        %v681 = vmul.f32 %v660, %v678
        %v682 = vmul.f32 %v661, %v676
        %v685 = vcombine.high %v681, %v681
        %686 = vrot.lane.b32.xlu0 %v681, 127
        %v687 = vpop.permute.xlu0 %686
        %688 = vrot.lane.b32.xlu0 %v685, 127
        %v689 = vpop.permute.xlu0 %688
        %690 = vrot.lane.b32.xlu0 %v682, 127
        %v691 = vpop.permute.xlu0 %690
        %vm692 = vcmask 1039360
        %v693 = vsel %vm692, %v687, %v689
        %v694 = vsel %vm692, %v689, %v691
        %697 = vst [vmem:[#allocation4 + $0x10] sm:$0xf] %v693
        %698 = vst [vmem:[#allocation4 + $0x18] sm:$0xf] %v694
        %v699 = vld [vmem:[#allocation2] sm:$0xff]
        %v700 = vld [vmem:[#allocation2 + $0x8] sm:$0xf]
        %s701 = scalar_lea.vmem %s1, 2
        %v702 = vld [vmem:[%s701] ss:$8 sm:$0x3]
        %v704 = vlaneseq
        %v705 = vshrl.u32 %v704, 7
        %v706 = vsub.s32 0, %v705
        %v707 = vrot.slane %v702, %v706
        %v708 = vlaneseq
        %v709 = vshrl.u32 %v708, 7
        %v710 = vsub.s32 1, %v709
        %v711 = vrot.slane %v702, %v710
        %v712 = vcombine.low %v707, %v711
        %713 = vrot.lane.b32.xlu0 %v712, 2
        %v714 = vpop.permute.xlu0 %713
        %v715 = vrot.slane %v714, 4
        %vm716 = vcmask 15360
        %v717 = vsel %vm716, %v715, %v714
        %v720 = vmul.f32 %v699, %v717
        %v721 = vmul.f32 %v700, %v715
        %v724 = vcombine.high %v720, %v720
        %725 = vrot.lane.b32.xlu0 %v720, 126
        %v726 = vpop.permute.xlu0 %725
        %727 = vrot.lane.b32.xlu0 %v724, 126
        %v728 = vpop.permute.xlu0 %727
        %729 = vrot.lane.b32.xlu0 %v721, 126
        %v730 = vpop.permute.xlu0 %729
        %vm731 = vcmask 1031168
        %v732 = vsel %vm731, %v726, %v728
        %v733 = vsel %vm731, %v728, %v730
        %736 = vst [vmem:[#allocation4 + $0x20] sm:$0xf] %v732
        %737 = vst [vmem:[#allocation4 + $0x28] sm:$0xf] %v733
        %v738 = vld [vmem:[#allocation2] sm:$0xff]
        %v739 = vld [vmem:[#allocation2 + $0x8] sm:$0xf]
        %s740 = scalar_lea.vmem %s1, 3
        %v741 = vld [vmem:[%s740] ss:$8 sm:$0x3]
        %v743 = vlaneseq
        %v744 = vshrl.u32 %v743, 7
        %v745 = vsub.s32 0, %v744
        %v746 = vrot.slane %v741, %v745
        %v747 = vlaneseq
        %v748 = vshrl.u32 %v747, 7
        %v749 = vsub.s32 1, %v748
        %v750 = vrot.slane %v741, %v749
        %v751 = vcombine.low %v746, %v750
        %752 = vrot.lane.b32.xlu0 %v751, 16
        %v753 = vpop.permute.xlu0 %752
        %v754 = vrot.slane %v753, 4
        %vm755 = vcmask 130048
        %v756 = vsel %vm755, %v754, %v753
        %v759 = vmul.f32 %v738, %v756
        %v760 = vmul.f32 %v739, %v754
        %v763 = vcombine.high %v759, %v759
        %764 = vrot.lane.b32.xlu0 %v759, 112
        %v765 = vpop.permute.xlu0 %764
        %766 = vrot.lane.b32.xlu0 %v763, 112
        %v767 = vpop.permute.xlu0 %766
        %768 = vrot.lane.b32.xlu0 %v760, 112
        %v769 = vpop.permute.xlu0 %768
        %vm770 = vcmask 916480
        %v771 = vsel %vm770, %v765, %v767
        %v772 = vsel %vm770, %v767, %v769
        %775 = vst [vmem:[#allocation4 + $0x30] sm:$0xf] %v771
        %776 = vst [vmem:[#allocation4 + $0x38] sm:$0xf] %v772
        %v777 = vld [vmem:[#allocation2] sm:$0xff]
        %v778 = vld [vmem:[#allocation2 + $0x8] sm:$0xf]
        %s779 = scalar_lea.vmem %s1, 4
        %v780 = vld [vmem:[%s779] ss:$8 sm:$0x3]
        %v782 = vlaneseq
        %v783 = vshrl.u32 %v782, 7
        %v784 = vsub.s32 0, %v783
        %v785 = vrot.slane %v780, %v784
        %v786 = vlaneseq
        %v787 = vshrl.u32 %v786, 7
        %v788 = vsub.s32 1, %v787
        %v789 = vrot.slane %v780, %v788
        %v790 = vcombine.low %v785, %v789
        %791 = vrot.lane.b32.xlu0 %v790, 17
        %v792 = vpop.permute.xlu0 %791
        %v793 = vrot.slane %v792, 4
        %v794 = vsel %vm631, %v793, %v792
        %v797 = vmul.f32 %v777, %v794
        %v798 = vmul.f32 %v778, %v793
        %v801 = vcombine.high %v797, %v797
        %802 = vrot.lane.b32.xlu0 %v797, 111
        %v803 = vpop.permute.xlu0 %802
        %804 = vrot.lane.b32.xlu0 %v801, 111
        %v805 = vpop.permute.xlu0 %804
        %806 = vrot.lane.b32.xlu0 %v798, 111
        %v807 = vpop.permute.xlu0 %806
        %vm808 = vcmask 908288
        %v809 = vsel %vm808, %v803, %v805
        %v810 = vsel %vm808, %v805, %v807
        %813 = vst [vmem:[#allocation4 + $0x40] sm:$0xf] %v809
        %814 = vst [vmem:[#allocation4 + $0x48] sm:$0xf] %v810
        %v815 = vld [vmem:[#allocation2] sm:$0xff]
        %v816 = vld [vmem:[#allocation2 + $0x8] sm:$0xf]
        %s817 = scalar_lea.vmem %s1, 5
        %v818 = vld [vmem:[%s817] ss:$8 sm:$0x3]
        %v820 = vlaneseq
        %v821 = vshrl.u32 %v820, 7
        %v822 = vsub.s32 0, %v821
        %v823 = vrot.slane %v818, %v822
        %v824 = vlaneseq
        %v825 = vshrl.u32 %v824, 7
        %v826 = vsub.s32 1, %v825
        %v827 = vrot.slane %v818, %v826
        %v828 = vcombine.low %v823, %v827
        %829 = vrot.lane.b32.xlu0 %v828, 18
        %v830 = vpop.permute.xlu0 %829
        %v831 = vrot.slane %v830, 4
        %vm832 = vcmask 146432
        %v833 = vsel %vm832, %v831, %v830
        %v836 = vmul.f32 %v815, %v833
        %v837 = vmul.f32 %v816, %v831
        %v840 = vcombine.high %v836, %v836
        %841 = vrot.lane.b32.xlu0 %v836, 110
        %v842 = vpop.permute.xlu0 %841
        %843 = vrot.lane.b32.xlu0 %v840, 110
        %v844 = vpop.permute.xlu0 %843
        %845 = vrot.lane.b32.xlu0 %v837, 110
        %v846 = vpop.permute.xlu0 %845
        %vm847 = vcmask 900096
        %v848 = vsel %vm847, %v842, %v844
        %v849 = vsel %vm847, %v844, %v846
        %852 = vst [vmem:[#allocation4 + $0x50] sm:$0xf] %v848
        %853 = vst [vmem:[#allocation4 + $0x58] sm:$0xf] %v849
        %v854 = vld [vmem:[#allocation2] sm:$0xff]
        %v855 = vld [vmem:[#allocation2 + $0x8] sm:$0xf]
        %s856 = scalar_lea.vmem %s1, 6
        %v857 = vld [vmem:[%s856] ss:$8 sm:$0x3]
        %v859 = vlaneseq
        %v860 = vshrl.u32 %v859, 7
        %v861 = vsub.s32 0, %v860
        %v862 = vrot.slane %v857, %v861
        %v863 = vlaneseq
        %v864 = vshrl.u32 %v863, 7
        %v865 = vsub.s32 1, %v864
        %v866 = vrot.slane %v857, %v865
        %v867 = vcombine.low %v862, %v866
        %868 = vrot.lane.b32.xlu0 %v867, 32
        %v869 = vpop.permute.xlu0 %868
        %v870 = vrot.slane %v869, 4
        %vm871 = vcmask 261120
        %v872 = vsel %vm871, %v870, %v869
        %v875 = vmul.f32 %v854, %v872
        %v876 = vmul.f32 %v855, %v870
        %v879 = vcombine.high %v875, %v875
        %880 = vrot.lane.b32.xlu0 %v875, 96
        %v881 = vpop.permute.xlu0 %880
        %882 = vrot.lane.b32.xlu0 %v879, 96
        %v883 = vpop.permute.xlu0 %882
        %884 = vrot.lane.b32.xlu0 %v876, 96
        %v885 = vpop.permute.xlu0 %884
        %vm886 = vcmask 785408
        %v887 = vsel %vm886, %v881, %v883
        %v888 = vsel %vm886, %v883, %v885
        %891 = vst [vmem:[#allocation4 + $0x60] sm:$0xf] %v887
        %892 = vst [vmem:[#allocation4 + $0x68] sm:$0xf] %v888
        %v893 = vld [vmem:[#allocation2] sm:$0xff]
        %v894 = vld [vmem:[#allocation2 + $0x8] sm:$0xf]
        %s895 = scalar_lea.vmem %s1, 7
        %v896 = vld [vmem:[%s895] ss:$8 sm:$0x3]
        %v898 = vlaneseq
        %v899 = vshrl.u32 %v898, 7
        %v900 = vsub.s32 0, %v899
        %v901 = vrot.slane %v896, %v900
        %v902 = vlaneseq
        %v903 = vshrl.u32 %v902, 7
        %v904 = vsub.s32 1, %v903
        %v905 = vrot.slane %v896, %v904
        %v906 = vcombine.low %v901, %v905
        %907 = vrot.lane.b32.xlu0 %v906, 33
        %v908 = vpop.permute.xlu0 %907
        %v909 = vrot.slane %v908, 4
        %vm910 = vcmask 269312
        %v911 = vsel %vm910, %v909, %v908
        %v914 = vmul.f32 %v893, %v911
        %v915 = vmul.f32 %v894, %v909
        %v918 = vcombine.high %v914, %v914
        %919 = vrot.lane.b32.xlu0 %v914, 95
        %v920 = vpop.permute.xlu0 %919
        %921 = vrot.lane.b32.xlu0 %v918, 95
        %v922 = vpop.permute.xlu0 %921
        %923 = vrot.lane.b32.xlu0 %v915, 95
        %v924 = vpop.permute.xlu0 %923
        %vm925 = vcmask 777216
        %v926 = vsel %vm925, %v920, %v922
        %v927 = vsel %vm925, %v922, %v924
        %930 = vst [vmem:[#allocation4 + $0x70] sm:$0xf] %v926
        %931 = vst [vmem:[#allocation4 + $0x78] sm:$0xf] %v927
        %v932 = vld [vmem:[#allocation2] sm:$0xff]
        %v933 = vld [vmem:[#allocation2 + $0x8] sm:$0xf]
        %s934 = scalar_lea.vmem %s1, 16
        %v935 = vld [vmem:[%s934] ss:$8 sm:$0x3]
        %v937 = vlaneseq
        %v938 = vshrl.u32 %v937, 7
        %v939 = vsub.s32 0, %v938
        %v940 = vrot.slane %v935, %v939
        %v941 = vlaneseq
        %v942 = vshrl.u32 %v941, 7
        %v943 = vsub.s32 1, %v942
        %v944 = vrot.slane %v935, %v943
        %v945 = vcombine.low %v940, %v944
        %946 = vrot.lane.b32.xlu0 %v945, 34
        %v947 = vpop.permute.xlu0 %946
        %v948 = vrot.slane %v947, 4
        %v949 = vsel %vm606, %v948, %v947
        %v952 = vmul.f32 %v932, %v949
        %v953 = vmul.f32 %v933, %v948
        %v956 = vcombine.high %v952, %v952
        %957 = vrot.lane.b32.xlu0 %v952, 94
        %v958 = vpop.permute.xlu0 %957
        %959 = vrot.lane.b32.xlu0 %v956, 94
        %v960 = vpop.permute.xlu0 %959
        %961 = vrot.lane.b32.xlu0 %v953, 94
        %v962 = vpop.permute.xlu0 %961
        %vm963 = vcmask 769024
        %v964 = vsel %vm963, %v958, %v960
        %v965 = vsel %vm963, %v960, %v962
        %968 = vst [vmem:[#allocation4 + $0x80] sm:$0xf] %v964
        %969 = vst [vmem:[#allocation4 + $0x88] sm:$0xf] %v965
        %v970 = vld [vmem:[%s3] sm:$0xff]
        %v971 = vld [vmem:[#allocation4] sm:$0xff]
        %v972 = vld [vmem:[#allocation4 + $0x8] sm:$0xff]
        %v973 = vld [vmem:[#allocation4 + $0x10] sm:$0xff]
        %v974 = vld [vmem:[#allocation4 + $0x18] sm:$0xff]
        %v975 = vld [vmem:[#allocation4 + $0x20] sm:$0xff]
        %v976 = vld [vmem:[#allocation4 + $0x28] sm:$0xff]
        %v977 = vld [vmem:[#allocation4 + $0x30] sm:$0xff]
        %v978 = vld [vmem:[#allocation4 + $0x38] sm:$0xff]
        %v979 = vld [vmem:[#allocation4 + $0x40] sm:$0xff]
        %v980 = vld [vmem:[#allocation4 + $0x48] sm:$0xff]
        %v981 = vld [vmem:[#allocation4 + $0x50] sm:$0xff]
        %v982 = vld [vmem:[#allocation4 + $0x58] sm:$0xff]
        %v983 = vld [vmem:[#allocation4 + $0x60] sm:$0xff]
        %v984 = vld [vmem:[#allocation4 + $0x68] sm:$0xff]
        %v985 = vld [vmem:[#allocation4 + $0x70] sm:$0xff]
        %v986 = vld [vmem:[#allocation4 + $0x78] sm:$0xff]
        %v987 = vld [vmem:[#allocation4 + $0x80] sm:$0xff]
        %v988 = vld [vmem:[#allocation4 + $0x88] sm:$0xff]
        %vm989 = vcmask 588800
        %v991 = vsel %vm989, %v970, 0
        %993 = vmatprep.subr.mxu0 %v972
        %994 = vmatpush1.msra.mxu0 %v971
        %995 = vmatprep.subr.mxu0 %v974
        %996 = vmatpush1.msra.mxu0 %v973
        %997 = vmatprep.subr.mxu0 %v976
        %998 = vmatpush1.msra.mxu0 %v975
        %999 = vmatprep.subr.mxu0 %v978
        %1000 = vmatpush1.msra.mxu0 %v977
        %1001 = vmatprep.subr.mxu0 %v980
        %1002 = vmatpush1.msra.mxu0 %v979
        %1003 = vmatprep.subr.mxu0 %v982
        %1004 = vmatpush1.msra.mxu0 %v981
        %1005 = vmatprep.subr.mxu0 %v984
        %1006 = vmatpush1.msra.mxu0 %v983
        %1007 = vmatprep.subr.mxu0 %v986
        %1008 = vmatpush1.msra.mxu0 %v985
        %1009 = vmatprep.subr.mxu0 %v988
        %1010 = vmatpush1.msra.mxu0 %v987
        %1011 = vmatprep.subr.mxu0 0.0
        %1012 = vmatpush1.msra.mxu0 0.0
        %1013 = vmatprep.subr.mxu0 0.0
        %1014 = vmatpush1.msra.mxu0 0.0
        %1015 = vmatprep.subr.mxu0 0.0
        %1016 = vmatpush1.msra.mxu0 0.0
        %1017 = vmatprep.subr.mxu0 0.0
        %1018 = vmatpush1.msra.mxu0 0.0
        %1019 = vmatprep.subr.mxu0 0.0
        %1020 = vmatpush1.msra.mxu0 0.0
        %1021 = vmatprep.subr.mxu0 0.0
        %1022 = vmatpush1.msra.mxu0 0.0
        %1023 = vmatprep.subr.mxu0 0.0
        %1024 = vmatpush1.msra.mxu0 0.0
        %1025 = vmatprep.subr.mxu0 0.0
        %1026 = vmatpush1.msra.mxu0 0.0
        %1027 = vmatprep.subr.mxu0 0.0
        %1028 = vmatpush1.msra.mxu0 0.0
        %1029 = vmatprep.subr.mxu0 0.0
        %1030 = vmatpush1.msra.mxu0 0.0
        %1031 = vmatprep.subr.mxu0 0.0
        %1032 = vmatpush1.msra.mxu0 0.0
        %1033 = vmatprep.subr.mxu0 0.0
        %1034 = vmatpush1.msra.mxu0 0.0
        %1035 = vmatprep.subr.mxu0 0.0
        %1036 = vmatpush1.msra.mxu0 0.0
        %1037 = vmatprep.subr.mxu0 0.0
        %1038 = vmatpush1.msra.mxu0 0.0
        %1039 = vmatprep.subr.mxu0 0.0
        %1040 = vmatpush1.msra.mxu0 0.0
        %1041 = vmatprep.subr.mxu0 0.0
        %1042 = vmatpush1.msra.mxu0 0.0
        %1043 = vmatprep.subr.mxu0 0.0
        %1044 = vmatpush1.msra.mxu0 0.0
        %1045 = vmatprep.subr.mxu0 0.0
        %1046 = vmatpush1.msra.mxu0 0.0
        %1047 = vmatprep.subr.mxu0 0.0
        %1048 = vmatpush1.msra.mxu0 0.0
        %1049 = vmatprep.subr.mxu0 0.0
        %1050 = vmatpush1.msra.mxu0 0.0
        %1051 = vmatprep.subr.mxu0 0.0
        %1052 = vmatpush1.msra.mxu0 0.0
        %1053 = vmatprep.subr.mxu0 0.0
        %1054 = vmatpush1.msra.mxu0 0.0
        %1055 = vmatprep.subr.mxu0 0.0
        %1056 = vmatpush1.msra.mxu0 0.0
        %1057 = vmatprep.mubr.f32.mxu0 0.0
        %1058 = vmatmul.mubr.f32.gmra.mrb[0].mxu0 %v991
        %v1059 = vpop.f32.mrb[0].mxu0
        %v1060 = vadd.f32 0.0, %v1059
        %v1061 = vpop.f32.mrb[0].mxu0
        %v1062 = vadd.f32 0.0, %v1061
        %1063 = vdwg.mxu0
        %v1064 = vld [vmem:[%s4] sm:$0xff]
        %1066 = vset.pattern.permute.xlu0 0
        %1067 = vperm.xlu0 %1066, %v1064
        %v1068 = vpop.permute.xlu0 %1067
        %v1070 = vmul.f32 %v1060, %v1068
        %v1071 = vmul.f32 %v1062, %v1068
        %v1072 = vld [vmem:[%s5] sm:$0xff]
        %1074 = vset.pattern.permute.xlu0 0
        %1075 = vperm.xlu0 %1074, %v1072
        %v1076 = vpop.permute.xlu0 %1075
        %v1078 = vadd.f32 %v1070, %v1076
        %v1079 = vadd.f32 %v1071, %v1076
        %v1080 = vmax.f32 %v1078, 0.0
        %v1081 = vmax.f32 %v1079, 0.0
        %1084 = vrot.lane.b32.xlu0 %v1080, 17
        %v1085 = vpop.permute.xlu0 %1084
        %1086 = vrot.lane.b32.xlu0 %v1081, 17
        %v1087 = vpop.permute.xlu0 %1086
        %v1088 = vsel %vm631, %v1085, %v1087
        %vm1092 = vcmask 1047688
        %1093 = vst.msk [vmem:[#allocation3] sm:$0xff] %vm1092, %v1085
        %1094 = vst [vmem:[#allocation3 + $0x8] sm:$0xff] %v1088
        %1095 = vst.msk [vmem:[#allocation3 + $0x10] sm:$0xff] %vm631, %v1087
        %v1096 = vld [vmem:[#allocation3] sm:$0xff]
        %v1097 = vld [vmem:[#allocation3 + $0x8] sm:$0xff]
        %v1098 = vld [vmem:[%s2] ss:$8 sm:$0x3]
        %v1100 = vlaneseq
        %v1101 = vshrl.u32 %v1100, 7
        %v1102 = vsub.s32 0, %v1101
        %v1103 = vrot.slane %v1098, %v1102
        %v1104 = vlaneseq
        %v1105 = vshrl.u32 %v1104, 7
        %v1106 = vsub.s32 1, %v1105
        %v1107 = vrot.slane %v1098, %v1106
        %v1110 = vmul.f32 %v1096, %v1103
        %v1111 = vmul.f32 %v1097, %v1107
        %1112 = vst [vmem:[#allocation4] sm:$0xff] %v1110
        %1113 = vst [vmem:[#allocation4 + $0x8] sm:$0xff] %v1111
        %v1114 = vld [vmem:[#allocation3] sm:$0xff]
        %v1115 = vld [vmem:[#allocation3 + $0x8] sm:$0xff]
        %v1116 = vld [vmem:[#allocation3 + $0x10] sm:$0xff]
        %s1117 = scalar_lea.vmem %s2, 1
        %v1118 = vld [vmem:[%s1117] ss:$8 sm:$0x3]
        %v1120 = vlaneseq
        %v1121 = vshrl.u32 %v1120, 7
        %v1122 = vsub.s32 0, %v1121
        %v1123 = vrot.slane %v1118, %v1122
        %v1124 = vlaneseq
        %v1125 = vshrl.u32 %v1124, 7
        %v1126 = vsub.s32 1, %v1125
        %v1127 = vrot.slane %v1118, %v1126
        %1128 = vrot.lane.b32.xlu0 %v1123, 1
        %v1129 = vpop.permute.xlu0 %1128
        %1130 = vrot.lane.b32.xlu0 %v1127, 1
        %v1131 = vpop.permute.xlu0 %1130
        %v1132 = vsel %vm677, %v1129, %v1131
        %v1136 = vmul.f32 %v1114, %v1129
        %v1137 = vmul.f32 %v1115, %v1132
        %v1138 = vmul.f32 %v1116, %v1131
        %1142 = vrot.lane.b32.xlu0 %v1136, 127
        %v1143 = vpop.permute.xlu0 %1142
        %1144 = vrot.lane.b32.xlu0 %v1137, 127
        %v1145 = vpop.permute.xlu0 %1144
        %1146 = vrot.lane.b32.xlu0 %v1138, 127
        %v1147 = vpop.permute.xlu0 %1146
        %v1148 = vsel %vm692, %v1143, %v1145
        %v1149 = vsel %vm692, %v1145, %v1147
        %1152 = vst [vmem:[#allocation4 + $0x10] sm:$0xff] %v1148
        %1153 = vst [vmem:[#allocation4 + $0x18] sm:$0xff] %v1149
        %v1154 = vld [vmem:[#allocation3] sm:$0xff]
        %v1155 = vld [vmem:[#allocation3 + $0x8] sm:$0xff]
        %v1156 = vld [vmem:[#allocation3 + $0x10] sm:$0xff]
        %s1157 = scalar_lea.vmem %s2, 2
        %v1158 = vld [vmem:[%s1157] ss:$8 sm:$0x3]
        %v1160 = vlaneseq
        %v1161 = vshrl.u32 %v1160, 7
        %v1162 = vsub.s32 0, %v1161
        %v1163 = vrot.slane %v1158, %v1162
        %v1164 = vlaneseq
        %v1165 = vshrl.u32 %v1164, 7
        %v1166 = vsub.s32 1, %v1165
        %v1167 = vrot.slane %v1158, %v1166
        %1168 = vrot.lane.b32.xlu0 %v1163, 2
        %v1169 = vpop.permute.xlu0 %1168
        %1170 = vrot.lane.b32.xlu0 %v1167, 2
        %v1171 = vpop.permute.xlu0 %1170
        %v1172 = vsel %vm716, %v1169, %v1171
        %v1176 = vmul.f32 %v1154, %v1169
        %v1177 = vmul.f32 %v1155, %v1172
        %v1178 = vmul.f32 %v1156, %v1171
        %1182 = vrot.lane.b32.xlu0 %v1176, 126
        %v1183 = vpop.permute.xlu0 %1182
        %1184 = vrot.lane.b32.xlu0 %v1177, 126
        %v1185 = vpop.permute.xlu0 %1184
        %1186 = vrot.lane.b32.xlu0 %v1178, 126
        %v1187 = vpop.permute.xlu0 %1186
        %v1188 = vsel %vm731, %v1183, %v1185
        %v1189 = vsel %vm731, %v1185, %v1187
        %1192 = vst [vmem:[#allocation4 + $0x20] sm:$0xff] %v1188
        %1193 = vst [vmem:[#allocation4 + $0x28] sm:$0xff] %v1189
        %v1194 = vld [vmem:[#allocation3] sm:$0xff]
        %v1195 = vld [vmem:[#allocation3 + $0x8] sm:$0xff]
        %v1196 = vld [vmem:[#allocation3 + $0x10] sm:$0xff]
        %s1197 = scalar_lea.vmem %s2, 3
        %v1198 = vld [vmem:[%s1197] ss:$8 sm:$0x3]
        %v1200 = vlaneseq
        %v1201 = vshrl.u32 %v1200, 7
        %v1202 = vsub.s32 0, %v1201
        %v1203 = vrot.slane %v1198, %v1202
        %v1204 = vlaneseq
        %v1205 = vshrl.u32 %v1204, 7
        %v1206 = vsub.s32 1, %v1205
        %v1207 = vrot.slane %v1198, %v1206
        %1208 = vrot.lane.b32.xlu0 %v1203, 16
        %v1209 = vpop.permute.xlu0 %1208
        %1210 = vrot.lane.b32.xlu0 %v1207, 16
        %v1211 = vpop.permute.xlu0 %1210
        %v1212 = vsel %vm755, %v1209, %v1211
        %v1216 = vmul.f32 %v1194, %v1209
        %v1217 = vmul.f32 %v1195, %v1212
        %v1218 = vmul.f32 %v1196, %v1211
        %1222 = vrot.lane.b32.xlu0 %v1216, 112
        %v1223 = vpop.permute.xlu0 %1222
        %1224 = vrot.lane.b32.xlu0 %v1217, 112
        %v1225 = vpop.permute.xlu0 %1224
        %1226 = vrot.lane.b32.xlu0 %v1218, 112
        %v1227 = vpop.permute.xlu0 %1226
        %v1228 = vsel %vm770, %v1223, %v1225
        %v1229 = vsel %vm770, %v1225, %v1227
        %1232 = vst [vmem:[#allocation4 + $0x30] sm:$0xff] %v1228
        %1233 = vst [vmem:[#allocation4 + $0x38] sm:$0xff] %v1229
        %v1234 = vld [vmem:[#allocation3] sm:$0xff]
        %v1235 = vld [vmem:[#allocation3 + $0x8] sm:$0xff]
        %v1236 = vld [vmem:[#allocation3 + $0x10] sm:$0xff]
        %s1237 = scalar_lea.vmem %s2, 4
        %v1238 = vld [vmem:[%s1237] ss:$8 sm:$0x3]
        %v1240 = vlaneseq
        %v1241 = vshrl.u32 %v1240, 7
        %v1242 = vsub.s32 0, %v1241
        %v1243 = vrot.slane %v1238, %v1242
        %v1244 = vlaneseq
        %v1245 = vshrl.u32 %v1244, 7
        %v1246 = vsub.s32 1, %v1245
        %v1247 = vrot.slane %v1238, %v1246
        %1248 = vrot.lane.b32.xlu0 %v1243, 17
        %v1249 = vpop.permute.xlu0 %1248
        %1250 = vrot.lane.b32.xlu0 %v1247, 17
        %v1251 = vpop.permute.xlu0 %1250
        %v1252 = vsel %vm631, %v1249, %v1251
        %v1256 = vmul.f32 %v1234, %v1249
        %v1257 = vmul.f32 %v1235, %v1252
        %v1258 = vmul.f32 %v1236, %v1251
        %1262 = vrot.lane.b32.xlu0 %v1256, 111
        %v1263 = vpop.permute.xlu0 %1262
        %1264 = vrot.lane.b32.xlu0 %v1257, 111
        %v1265 = vpop.permute.xlu0 %1264
        %1266 = vrot.lane.b32.xlu0 %v1258, 111
        %v1267 = vpop.permute.xlu0 %1266
        %v1268 = vsel %vm808, %v1263, %v1265
        %v1269 = vsel %vm808, %v1265, %v1267
        %1272 = vst [vmem:[#allocation4 + $0x40] sm:$0xff] %v1268
        %1273 = vst [vmem:[#allocation4 + $0x48] sm:$0xff] %v1269
        %v1274 = vld [vmem:[#allocation3] sm:$0xff]
        %v1275 = vld [vmem:[#allocation3 + $0x8] sm:$0xff]
        %v1276 = vld [vmem:[#allocation3 + $0x10] sm:$0xff]
        %s1277 = scalar_lea.vmem %s2, 5
        %v1278 = vld [vmem:[%s1277] ss:$8 sm:$0x3]
        %v1280 = vlaneseq
        %v1281 = vshrl.u32 %v1280, 7
        %v1282 = vsub.s32 0, %v1281
        %v1283 = vrot.slane %v1278, %v1282
        %v1284 = vlaneseq
        %v1285 = vshrl.u32 %v1284, 7
        %v1286 = vsub.s32 1, %v1285
        %v1287 = vrot.slane %v1278, %v1286
        %1288 = vrot.lane.b32.xlu0 %v1283, 18
        %v1289 = vpop.permute.xlu0 %1288
        %1290 = vrot.lane.b32.xlu0 %v1287, 18
        %v1291 = vpop.permute.xlu0 %1290
        %v1292 = vsel %vm832, %v1289, %v1291
        %v1296 = vmul.f32 %v1274, %v1289
        %v1297 = vmul.f32 %v1275, %v1292
        %v1298 = vmul.f32 %v1276, %v1291
        %1302 = vrot.lane.b32.xlu0 %v1296, 110
        %v1303 = vpop.permute.xlu0 %1302
        %1304 = vrot.lane.b32.xlu0 %v1297, 110
        %v1305 = vpop.permute.xlu0 %1304
        %1306 = vrot.lane.b32.xlu0 %v1298, 110
        %v1307 = vpop.permute.xlu0 %1306
        %v1308 = vsel %vm847, %v1303, %v1305
        %v1309 = vsel %vm847, %v1305, %v1307
        %1312 = vst [vmem:[#allocation4 + $0x50] sm:$0xff] %v1308
        %1313 = vst [vmem:[#allocation4 + $0x58] sm:$0xff] %v1309
        %v1314 = vld [vmem:[#allocation3] sm:$0xff]
        %v1315 = vld [vmem:[#allocation3 + $0x8] sm:$0xff]
        %v1316 = vld [vmem:[#allocation3 + $0x10] sm:$0xff]
        %s1317 = scalar_lea.vmem %s2, 6
        %v1318 = vld [vmem:[%s1317] ss:$8 sm:$0x3]
        %v1320 = vlaneseq
        %v1321 = vshrl.u32 %v1320, 7
        %v1322 = vsub.s32 0, %v1321
        %v1323 = vrot.slane %v1318, %v1322
        %v1324 = vlaneseq
        %v1325 = vshrl.u32 %v1324, 7
        %v1326 = vsub.s32 1, %v1325
        %v1327 = vrot.slane %v1318, %v1326
        %1328 = vrot.lane.b32.xlu0 %v1323, 32
        %v1329 = vpop.permute.xlu0 %1328
        %1330 = vrot.lane.b32.xlu0 %v1327, 32
        %v1331 = vpop.permute.xlu0 %1330
        %v1332 = vsel %vm871, %v1329, %v1331
        %v1336 = vmul.f32 %v1314, %v1329
        %v1337 = vmul.f32 %v1315, %v1332
        %v1338 = vmul.f32 %v1316, %v1331
        %1342 = vrot.lane.b32.xlu0 %v1336, 96
        %v1343 = vpop.permute.xlu0 %1342
        %1344 = vrot.lane.b32.xlu0 %v1337, 96
        %v1345 = vpop.permute.xlu0 %1344
        %1346 = vrot.lane.b32.xlu0 %v1338, 96
        %v1347 = vpop.permute.xlu0 %1346
        %v1348 = vsel %vm886, %v1343, %v1345
        %v1349 = vsel %vm886, %v1345, %v1347
        %1352 = vst [vmem:[#allocation4 + $0x60] sm:$0xff] %v1348
        %1353 = vst [vmem:[#allocation4 + $0x68] sm:$0xff] %v1349
        %v1354 = vld [vmem:[#allocation3] sm:$0xff]
        %v1355 = vld [vmem:[#allocation3 + $0x8] sm:$0xff]
        %v1356 = vld [vmem:[#allocation3 + $0x10] sm:$0xff]
        %s1357 = scalar_lea.vmem %s2, 7
        %v1358 = vld [vmem:[%s1357] ss:$8 sm:$0x3]
        %v1360 = vlaneseq
        %v1361 = vshrl.u32 %v1360, 7
        %v1362 = vsub.s32 0, %v1361
        %v1363 = vrot.slane %v1358, %v1362
        %v1364 = vlaneseq
        %v1365 = vshrl.u32 %v1364, 7
        %v1366 = vsub.s32 1, %v1365
        %v1367 = vrot.slane %v1358, %v1366
        %1368 = vrot.lane.b32.xlu0 %v1363, 33
        %v1369 = vpop.permute.xlu0 %1368
        %1370 = vrot.lane.b32.xlu0 %v1367, 33
        %v1371 = vpop.permute.xlu0 %1370
        %v1372 = vsel %vm910, %v1369, %v1371
        %v1376 = vmul.f32 %v1354, %v1369
        %v1377 = vmul.f32 %v1355, %v1372
        %v1378 = vmul.f32 %v1356, %v1371
        %1382 = vrot.lane.b32.xlu0 %v1376, 95
        %v1383 = vpop.permute.xlu0 %1382
        %1384 = vrot.lane.b32.xlu0 %v1377, 95
        %v1385 = vpop.permute.xlu0 %1384
        %1386 = vrot.lane.b32.xlu0 %v1378, 95
        %v1387 = vpop.permute.xlu0 %1386
        %v1388 = vsel %vm925, %v1383, %v1385
        %v1389 = vsel %vm925, %v1385, %v1387
        %1392 = vst [vmem:[#allocation4 + $0x70] sm:$0xff] %v1388
        %1393 = vst [vmem:[#allocation4 + $0x78] sm:$0xff] %v1389
        %v1394 = vld [vmem:[#allocation3] sm:$0xff]
        %v1395 = vld [vmem:[#allocation3 + $0x8] sm:$0xff]
        %v1396 = vld [vmem:[#allocation3 + $0x10] sm:$0xff]
        %s1397 = scalar_lea.vmem %s2, 16
        %v1398 = vld [vmem:[%s1397] ss:$8 sm:$0x3]
        %v1400 = vlaneseq
        %v1401 = vshrl.u32 %v1400, 7
        %v1402 = vsub.s32 0, %v1401
        %v1403 = vrot.slane %v1398, %v1402
        %v1404 = vlaneseq
        %v1405 = vshrl.u32 %v1404, 7
        %v1406 = vsub.s32 1, %v1405
        %v1407 = vrot.slane %v1398, %v1406
        %1408 = vrot.lane.b32.xlu0 %v1403, 34
        %v1409 = vpop.permute.xlu0 %1408
        %1410 = vrot.lane.b32.xlu0 %v1407, 34
        %v1411 = vpop.permute.xlu0 %1410
        %v1412 = vsel %vm606, %v1409, %v1411
        %v1416 = vmul.f32 %v1394, %v1409
        %v1417 = vmul.f32 %v1395, %v1412
        %v1418 = vmul.f32 %v1396, %v1411
        %1422 = vrot.lane.b32.xlu0 %v1416, 94
        %v1423 = vpop.permute.xlu0 %1422
        %1424 = vrot.lane.b32.xlu0 %v1417, 94
        %v1425 = vpop.permute.xlu0 %1424
        %1426 = vrot.lane.b32.xlu0 %v1418, 94
        %v1427 = vpop.permute.xlu0 %1426
        %v1428 = vsel %vm963, %v1423, %v1425
        %v1429 = vsel %vm963, %v1425, %v1427
        %1432 = vst [vmem:[#allocation4 + $0x80] sm:$0xff] %v1428
        %1433 = vst [vmem:[#allocation4 + $0x88] sm:$0xff] %v1429
        %v1434 = vld [vmem:[%s6] sm:$0xff]
        %v1435 = vld [vmem:[#allocation4] sm:$0xff]
        %v1436 = vld [vmem:[#allocation4 + $0x8] sm:$0xff]
        %v1437 = vld [vmem:[#allocation4 + $0x10] sm:$0xff]
        %v1438 = vld [vmem:[#allocation4 + $0x18] sm:$0xff]
        %v1439 = vld [vmem:[#allocation4 + $0x20] sm:$0xff]
        %v1440 = vld [vmem:[#allocation4 + $0x28] sm:$0xff]
        %v1441 = vld [vmem:[#allocation4 + $0x30] sm:$0xff]
        %v1442 = vld [vmem:[#allocation4 + $0x38] sm:$0xff]
        %v1443 = vld [vmem:[#allocation4 + $0x40] sm:$0xff]
        %v1444 = vld [vmem:[#allocation4 + $0x48] sm:$0xff]
        %v1445 = vld [vmem:[#allocation4 + $0x50] sm:$0xff]
        %v1446 = vld [vmem:[#allocation4 + $0x58] sm:$0xff]
        %v1447 = vld [vmem:[#allocation4 + $0x60] sm:$0xff]
        %v1448 = vld [vmem:[#allocation4 + $0x68] sm:$0xff]
        %v1449 = vld [vmem:[#allocation4 + $0x70] sm:$0xff]
        %v1450 = vld [vmem:[#allocation4 + $0x78] sm:$0xff]
        %v1451 = vld [vmem:[#allocation4 + $0x80] sm:$0xff]
        %v1452 = vld [vmem:[#allocation4 + $0x88] sm:$0xff]
        %v1454 = vsel %vm989, %v1434, 0
        %1456 = vmatprep.subr.mxu0 %v1436
        %1457 = vmatpush1.msra.mxu0 %v1435
        %1458 = vmatprep.subr.mxu0 %v1438
        %1459 = vmatpush1.msra.mxu0 %v1437
        %1460 = vmatprep.subr.mxu0 %v1440
        %1461 = vmatpush1.msra.mxu0 %v1439
        %1462 = vmatprep.subr.mxu0 %v1442
        %1463 = vmatpush1.msra.mxu0 %v1441
        %1464 = vmatprep.subr.mxu0 %v1444
        %1465 = vmatpush1.msra.mxu0 %v1443
        %1466 = vmatprep.subr.mxu0 %v1446
        %1467 = vmatpush1.msra.mxu0 %v1445
        %1468 = vmatprep.subr.mxu0 %v1448
        %1469 = vmatpush1.msra.mxu0 %v1447
        %1470 = vmatprep.subr.mxu0 %v1450
        %1471 = vmatpush1.msra.mxu0 %v1449
        %1472 = vmatprep.subr.mxu0 %v1452
        %1473 = vmatpush1.msra.mxu0 %v1451
        %1474 = vmatprep.subr.mxu0 0.0
        %1475 = vmatpush1.msra.mxu0 0.0
        %1476 = vmatprep.subr.mxu0 0.0
        %1477 = vmatpush1.msra.mxu0 0.0
        %1478 = vmatprep.subr.mxu0 0.0
        %1479 = vmatpush1.msra.mxu0 0.0
        %1480 = vmatprep.subr.mxu0 0.0
        %1481 = vmatpush1.msra.mxu0 0.0
        %1482 = vmatprep.subr.mxu0 0.0
        %1483 = vmatpush1.msra.mxu0 0.0
        %1484 = vmatprep.subr.mxu0 0.0
        %1485 = vmatpush1.msra.mxu0 0.0
        %1486 = vmatprep.subr.mxu0 0.0
        %1487 = vmatpush1.msra.mxu0 0.0
        %1488 = vmatprep.subr.mxu0 0.0
        %1489 = vmatpush1.msra.mxu0 0.0
        %1490 = vmatprep.subr.mxu0 0.0
        %1491 = vmatpush1.msra.mxu0 0.0
        %1492 = vmatprep.subr.mxu0 0.0
        %1493 = vmatpush1.msra.mxu0 0.0
        %1494 = vmatprep.subr.mxu0 0.0
        %1495 = vmatpush1.msra.mxu0 0.0
        %1496 = vmatprep.subr.mxu0 0.0
        %1497 = vmatpush1.msra.mxu0 0.0
        %1498 = vmatprep.subr.mxu0 0.0
        %1499 = vmatpush1.msra.mxu0 0.0
        %1500 = vmatprep.subr.mxu0 0.0
        %1501 = vmatpush1.msra.mxu0 0.0
        %1502 = vmatprep.subr.mxu0 0.0
        %1503 = vmatpush1.msra.mxu0 0.0
        %1504 = vmatprep.subr.mxu0 0.0
        %1505 = vmatpush1.msra.mxu0 0.0
        %1506 = vmatprep.subr.mxu0 0.0
        %1507 = vmatpush1.msra.mxu0 0.0
        %1508 = vmatprep.subr.mxu0 0.0
        %1509 = vmatpush1.msra.mxu0 0.0
        %1510 = vmatprep.subr.mxu0 0.0
        %1511 = vmatpush1.msra.mxu0 0.0
        %1512 = vmatprep.subr.mxu0 0.0
        %1513 = vmatpush1.msra.mxu0 0.0
        %1514 = vmatprep.subr.mxu0 0.0
        %1515 = vmatpush1.msra.mxu0 0.0
        %1516 = vmatprep.subr.mxu0 0.0
        %1517 = vmatpush1.msra.mxu0 0.0
        %1518 = vmatprep.subr.mxu0 0.0
        %1519 = vmatpush1.msra.mxu0 0.0
        %1520 = vmatprep.mubr.f32.mxu0 0.0
        %1521 = vmatmul.mubr.f32.gmra.mrb[0].mxu0 %v1454
        %v1522 = vpop.f32.mrb[0].mxu0
        %v1523 = vadd.f32 0.0, %v1522
        %v1524 = vpop.f32.mrb[0].mxu0
        %v1525 = vadd.f32 0.0, %v1524
        %1526 = vdwg.mxu0
        %v1527 = vld [vmem:[%s7] sm:$0xff]
        %1529 = vset.pattern.permute.xlu0 0
        %1530 = vperm.xlu0 %1529, %v1527
        %v1531 = vpop.permute.xlu0 %1530
        %v1533 = vmul.f32 %v1523, %v1531
        %v1534 = vmul.f32 %v1525, %v1531
        %v1535 = vld [vmem:[%s8] sm:$0xff]
        %1537 = vset.pattern.permute.xlu0 0
        %1538 = vperm.xlu0 %1537, %v1535
        %v1539 = vpop.permute.xlu0 %1538
        %v1541 = vadd.f32 %v1533, %v1539
        %v1542 = vadd.f32 %v1534, %v1539
        %v1543 = vmax.f32 %v1541, 0.0
        %v1544 = vmax.f32 %v1542, 0.0
        %1547 = vrot.lane.b32.xlu0 %v1543, 17
        %v1548 = vpop.permute.xlu0 %1547
        %1549 = vrot.lane.b32.xlu0 %v1544, 17
        %v1550 = vpop.permute.xlu0 %1549
        %v1551 = vsel %vm631, %v1548, %v1550
        %1555 = vst.msk [vmem:[#allocation3] sm:$0xff] %vm1092, %v1548
        %1556 = vst [vmem:[#allocation3 + $0x8] sm:$0xff] %v1551
        %1557 = vst.msk [vmem:[#allocation3 + $0x10] sm:$0xff] %vm631, %v1550
        %v1558 = vld [vmem:[#allocation3] sm:$0xff]
        %v1559 = vld [vmem:[#allocation3 + $0x8] sm:$0xff]
        %v1560 = vld [vmem:[%s2] ss:$8 sm:$0x3]
        %v1562 = vlaneseq
        %v1563 = vshrl.u32 %v1562, 7
        %v1564 = vsub.s32 0, %v1563
        %v1565 = vrot.slane %v1560, %v1564
        %v1566 = vlaneseq
        %v1567 = vshrl.u32 %v1566, 7
        %v1568 = vsub.s32 1, %v1567
        %v1569 = vrot.slane %v1560, %v1568
        %v1572 = vmul.f32 %v1558, %v1565
        %v1573 = vmul.f32 %v1559, %v1569
        %1574 = vst [vmem:[#allocation4] sm:$0xff] %v1572
        %1575 = vst [vmem:[#allocation4 + $0x8] sm:$0xff] %v1573
        %v1576 = vld [vmem:[#allocation3] sm:$0xff]
        %v1577 = vld [vmem:[#allocation3 + $0x8] sm:$0xff]
        %v1578 = vld [vmem:[#allocation3 + $0x10] sm:$0xff]
        %v1579 = vld [vmem:[%s1117] ss:$8 sm:$0x3]
        %v1581 = vlaneseq
        %v1582 = vshrl.u32 %v1581, 7
        %v1583 = vsub.s32 0, %v1582
        %v1584 = vrot.slane %v1579, %v1583
        %v1585 = vlaneseq
        %v1586 = vshrl.u32 %v1585, 7
        %v1587 = vsub.s32 1, %v1586
        %v1588 = vrot.slane %v1579, %v1587
        %1589 = vrot.lane.b32.xlu0 %v1584, 1
        %v1590 = vpop.permute.xlu0 %1589
        %1591 = vrot.lane.b32.xlu0 %v1588, 1
        %v1592 = vpop.permute.xlu0 %1591
        %v1593 = vsel %vm677, %v1590, %v1592
        %v1597 = vmul.f32 %v1576, %v1590
        %v1598 = vmul.f32 %v1577, %v1593
        %v1599 = vmul.f32 %v1578, %v1592
        %1603 = vrot.lane.b32.xlu0 %v1597, 127
        %v1604 = vpop.permute.xlu0 %1603
        %1605 = vrot.lane.b32.xlu0 %v1598, 127
        %v1606 = vpop.permute.xlu0 %1605
        %1607 = vrot.lane.b32.xlu0 %v1599, 127
        %v1608 = vpop.permute.xlu0 %1607
        %v1609 = vsel %vm692, %v1604, %v1606
        %v1610 = vsel %vm692, %v1606, %v1608
        %1613 = vst [vmem:[#allocation4 + $0x10] sm:$0xff] %v1609
        %1614 = vst [vmem:[#allocation4 + $0x18] sm:$0xff] %v1610
        %v1615 = vld [vmem:[#allocation3] sm:$0xff]
        %v1616 = vld [vmem:[#allocation3 + $0x8] sm:$0xff]
        %v1617 = vld [vmem:[#allocation3 + $0x10] sm:$0xff]
        %v1618 = vld [vmem:[%s1157] ss:$8 sm:$0x3]
        %v1620 = vlaneseq
        %v1621 = vshrl.u32 %v1620, 7
        %v1622 = vsub.s32 0, %v1621
        %v1623 = vrot.slane %v1618, %v1622
        %v1624 = vlaneseq
        %v1625 = vshrl.u32 %v1624, 7
        %v1626 = vsub.s32 1, %v1625
        %v1627 = vrot.slane %v1618, %v1626
        %1628 = vrot.lane.b32.xlu0 %v1623, 2
        %v1629 = vpop.permute.xlu0 %1628
        %1630 = vrot.lane.b32.xlu0 %v1627, 2
        %v1631 = vpop.permute.xlu0 %1630
        %v1632 = vsel %vm716, %v1629, %v1631
        %v1636 = vmul.f32 %v1615, %v1629
        %v1637 = vmul.f32 %v1616, %v1632
        %v1638 = vmul.f32 %v1617, %v1631
        %1642 = vrot.lane.b32.xlu0 %v1636, 126
        %v1643 = vpop.permute.xlu0 %1642
        %1644 = vrot.lane.b32.xlu0 %v1637, 126
        %v1645 = vpop.permute.xlu0 %1644
        %1646 = vrot.lane.b32.xlu0 %v1638, 126
        %v1647 = vpop.permute.xlu0 %1646
        %v1648 = vsel %vm731, %v1643, %v1645
        %v1649 = vsel %vm731, %v1645, %v1647
        %1652 = vst [vmem:[#allocation4 + $0x20] sm:$0xff] %v1648
        %1653 = vst [vmem:[#allocation4 + $0x28] sm:$0xff] %v1649
        %v1654 = vld [vmem:[#allocation3] sm:$0xff]
        %v1655 = vld [vmem:[#allocation3 + $0x8] sm:$0xff]
        %v1656 = vld [vmem:[#allocation3 + $0x10] sm:$0xff]
        %v1657 = vld [vmem:[%s1197] ss:$8 sm:$0x3]
        %v1659 = vlaneseq
        %v1660 = vshrl.u32 %v1659, 7
        %v1661 = vsub.s32 0, %v1660
        %v1662 = vrot.slane %v1657, %v1661
        %v1663 = vlaneseq
        %v1664 = vshrl.u32 %v1663, 7
        %v1665 = vsub.s32 1, %v1664
        %v1666 = vrot.slane %v1657, %v1665
        %1667 = vrot.lane.b32.xlu0 %v1662, 16
        %v1668 = vpop.permute.xlu0 %1667
        %1669 = vrot.lane.b32.xlu0 %v1666, 16
        %v1670 = vpop.permute.xlu0 %1669
        %v1671 = vsel %vm755, %v1668, %v1670
        %v1675 = vmul.f32 %v1654, %v1668
        %v1676 = vmul.f32 %v1655, %v1671
        %v1677 = vmul.f32 %v1656, %v1670
        %1681 = vrot.lane.b32.xlu0 %v1675, 112
        %v1682 = vpop.permute.xlu0 %1681
        %1683 = vrot.lane.b32.xlu0 %v1676, 112
        %v1684 = vpop.permute.xlu0 %1683
        %1685 = vrot.lane.b32.xlu0 %v1677, 112
        %v1686 = vpop.permute.xlu0 %1685
        %v1687 = vsel %vm770, %v1682, %v1684
        %v1688 = vsel %vm770, %v1684, %v1686
        %1691 = vst [vmem:[#allocation4 + $0x30] sm:$0xff] %v1687
        %1692 = vst [vmem:[#allocation4 + $0x38] sm:$0xff] %v1688
        %v1693 = vld [vmem:[#allocation3] sm:$0xff]
        %v1694 = vld [vmem:[#allocation3 + $0x8] sm:$0xff]
        %v1695 = vld [vmem:[#allocation3 + $0x10] sm:$0xff]
        %v1696 = vld [vmem:[%s1237] ss:$8 sm:$0x3]
        %v1698 = vlaneseq
        %v1699 = vshrl.u32 %v1698, 7
        %v1700 = vsub.s32 0, %v1699
        %v1701 = vrot.slane %v1696, %v1700
        %v1702 = vlaneseq
        %v1703 = vshrl.u32 %v1702, 7
        %v1704 = vsub.s32 1, %v1703
        %v1705 = vrot.slane %v1696, %v1704
        %1706 = vrot.lane.b32.xlu0 %v1701, 17
        %v1707 = vpop.permute.xlu0 %1706
        %1708 = vrot.lane.b32.xlu0 %v1705, 17
        %v1709 = vpop.permute.xlu0 %1708
        %v1710 = vsel %vm631, %v1707, %v1709
        %v1714 = vmul.f32 %v1693, %v1707
        %v1715 = vmul.f32 %v1694, %v1710
        %v1716 = vmul.f32 %v1695, %v1709
        %1720 = vrot.lane.b32.xlu0 %v1714, 111
        %v1721 = vpop.permute.xlu0 %1720
        %1722 = vrot.lane.b32.xlu0 %v1715, 111
        %v1723 = vpop.permute.xlu0 %1722
        %1724 = vrot.lane.b32.xlu0 %v1716, 111
        %v1725 = vpop.permute.xlu0 %1724
        %v1726 = vsel %vm808, %v1721, %v1723
        %v1727 = vsel %vm808, %v1723, %v1725
        %1730 = vst [vmem:[#allocation4 + $0x40] sm:$0xff] %v1726
        %1731 = vst [vmem:[#allocation4 + $0x48] sm:$0xff] %v1727
        %v1732 = vld [vmem:[#allocation3] sm:$0xff]
        %v1733 = vld [vmem:[#allocation3 + $0x8] sm:$0xff]
        %v1734 = vld [vmem:[#allocation3 + $0x10] sm:$0xff]
        %v1735 = vld [vmem:[%s1277] ss:$8 sm:$0x3]
        %v1737 = vlaneseq
        %v1738 = vshrl.u32 %v1737, 7
        %v1739 = vsub.s32 0, %v1738
        %v1740 = vrot.slane %v1735, %v1739
        %v1741 = vlaneseq
        %v1742 = vshrl.u32 %v1741, 7
        %v1743 = vsub.s32 1, %v1742
        %v1744 = vrot.slane %v1735, %v1743
        %1745 = vrot.lane.b32.xlu0 %v1740, 18
        %v1746 = vpop.permute.xlu0 %1745
        %1747 = vrot.lane.b32.xlu0 %v1744, 18
        %v1748 = vpop.permute.xlu0 %1747
        %v1749 = vsel %vm832, %v1746, %v1748
        %v1753 = vmul.f32 %v1732, %v1746
        %v1754 = vmul.f32 %v1733, %v1749
        %v1755 = vmul.f32 %v1734, %v1748
        %1759 = vrot.lane.b32.xlu0 %v1753, 110
        %v1760 = vpop.permute.xlu0 %1759
        %1761 = vrot.lane.b32.xlu0 %v1754, 110
        %v1762 = vpop.permute.xlu0 %1761
        %1763 = vrot.lane.b32.xlu0 %v1755, 110
        %v1764 = vpop.permute.xlu0 %1763
        %v1765 = vsel %vm847, %v1760, %v1762
        %v1766 = vsel %vm847, %v1762, %v1764
        %1769 = vst [vmem:[#allocation4 + $0x50] sm:$0xff] %v1765
        %1770 = vst [vmem:[#allocation4 + $0x58] sm:$0xff] %v1766
        %v1771 = vld [vmem:[#allocation3] sm:$0xff]
        %v1772 = vld [vmem:[#allocation3 + $0x8] sm:$0xff]
        %v1773 = vld [vmem:[#allocation3 + $0x10] sm:$0xff]
        %v1774 = vld [vmem:[%s1317] ss:$8 sm:$0x3]
        %v1776 = vlaneseq
        %v1777 = vshrl.u32 %v1776, 7
        %v1778 = vsub.s32 0, %v1777
        %v1779 = vrot.slane %v1774, %v1778
        %v1780 = vlaneseq
        %v1781 = vshrl.u32 %v1780, 7
        %v1782 = vsub.s32 1, %v1781
        %v1783 = vrot.slane %v1774, %v1782
        %1784 = vrot.lane.b32.xlu0 %v1779, 32
        %v1785 = vpop.permute.xlu0 %1784
        %1786 = vrot.lane.b32.xlu0 %v1783, 32
        %v1787 = vpop.permute.xlu0 %1786
        %v1788 = vsel %vm871, %v1785, %v1787
        %v1792 = vmul.f32 %v1771, %v1785
        %v1793 = vmul.f32 %v1772, %v1788
        %v1794 = vmul.f32 %v1773, %v1787
        %1798 = vrot.lane.b32.xlu0 %v1792, 96
        %v1799 = vpop.permute.xlu0 %1798
        %1800 = vrot.lane.b32.xlu0 %v1793, 96
        %v1801 = vpop.permute.xlu0 %1800
        %1802 = vrot.lane.b32.xlu0 %v1794, 96
        %v1803 = vpop.permute.xlu0 %1802
        %v1804 = vsel %vm886, %v1799, %v1801
        %v1805 = vsel %vm886, %v1801, %v1803
        %1808 = vst [vmem:[#allocation4 + $0x60] sm:$0xff] %v1804
        %1809 = vst [vmem:[#allocation4 + $0x68] sm:$0xff] %v1805
        %v1810 = vld [vmem:[#allocation3] sm:$0xff]
        %v1811 = vld [vmem:[#allocation3 + $0x8] sm:$0xff]
        %v1812 = vld [vmem:[#allocation3 + $0x10] sm:$0xff]
        %v1813 = vld [vmem:[%s1357] ss:$8 sm:$0x3]
        %v1815 = vlaneseq
        %v1816 = vshrl.u32 %v1815, 7
        %v1817 = vsub.s32 0, %v1816
        %v1818 = vrot.slane %v1813, %v1817
        %v1819 = vlaneseq
        %v1820 = vshrl.u32 %v1819, 7
        %v1821 = vsub.s32 1, %v1820
        %v1822 = vrot.slane %v1813, %v1821
        %1823 = vrot.lane.b32.xlu0 %v1818, 33
        %v1824 = vpop.permute.xlu0 %1823
        %1825 = vrot.lane.b32.xlu0 %v1822, 33
        %v1826 = vpop.permute.xlu0 %1825
        %v1827 = vsel %vm910, %v1824, %v1826
        %v1831 = vmul.f32 %v1810, %v1824
        %v1832 = vmul.f32 %v1811, %v1827
        %v1833 = vmul.f32 %v1812, %v1826
        %1837 = vrot.lane.b32.xlu0 %v1831, 95
        %v1838 = vpop.permute.xlu0 %1837
        %1839 = vrot.lane.b32.xlu0 %v1832, 95
        %v1840 = vpop.permute.xlu0 %1839
        %1841 = vrot.lane.b32.xlu0 %v1833, 95
        %v1842 = vpop.permute.xlu0 %1841
        %v1843 = vsel %vm925, %v1838, %v1840
        %v1844 = vsel %vm925, %v1840, %v1842
        %1847 = vst [vmem:[#allocation4 + $0x70] sm:$0xff] %v1843
        %1848 = vst [vmem:[#allocation4 + $0x78] sm:$0xff] %v1844
        %v1849 = vld [vmem:[#allocation3] sm:$0xff]
        %v1850 = vld [vmem:[#allocation3 + $0x8] sm:$0xff]
        %v1851 = vld [vmem:[#allocation3 + $0x10] sm:$0xff]
        %v1852 = vld [vmem:[%s1397] ss:$8 sm:$0x3]
        %v1854 = vlaneseq
        %v1855 = vshrl.u32 %v1854, 7
        %v1856 = vsub.s32 0, %v1855
        %v1857 = vrot.slane %v1852, %v1856
        %v1858 = vlaneseq
        %v1859 = vshrl.u32 %v1858, 7
        %v1860 = vsub.s32 1, %v1859
        %v1861 = vrot.slane %v1852, %v1860
        %1862 = vrot.lane.b32.xlu0 %v1857, 34
        %v1863 = vpop.permute.xlu0 %1862
        %1864 = vrot.lane.b32.xlu0 %v1861, 34
        %v1865 = vpop.permute.xlu0 %1864
        %v1866 = vsel %vm606, %v1863, %v1865
        %v1870 = vmul.f32 %v1849, %v1863
        %v1871 = vmul.f32 %v1850, %v1866
        %v1872 = vmul.f32 %v1851, %v1865
        %1876 = vrot.lane.b32.xlu0 %v1870, 94
        %v1877 = vpop.permute.xlu0 %1876
        %1878 = vrot.lane.b32.xlu0 %v1871, 94
        %v1879 = vpop.permute.xlu0 %1878
        %1880 = vrot.lane.b32.xlu0 %v1872, 94
        %v1881 = vpop.permute.xlu0 %1880
        %v1882 = vsel %vm963, %v1877, %v1879
        %v1883 = vsel %vm963, %v1879, %v1881
        %1886 = vst [vmem:[#allocation4 + $0x80] sm:$0xff] %v1882
        %1887 = vst [vmem:[#allocation4 + $0x88] sm:$0xff] %v1883
        %v1888 = vld [vmem:[%s9] sm:$0xff]
        %v1889 = vld [vmem:[#allocation4] sm:$0xff]
        %v1890 = vld [vmem:[#allocation4 + $0x8] sm:$0xff]
        %v1891 = vld [vmem:[#allocation4 + $0x10] sm:$0xff]
        %v1892 = vld [vmem:[#allocation4 + $0x18] sm:$0xff]
        %v1893 = vld [vmem:[#allocation4 + $0x20] sm:$0xff]
        %v1894 = vld [vmem:[#allocation4 + $0x28] sm:$0xff]
        %v1895 = vld [vmem:[#allocation4 + $0x30] sm:$0xff]
        %v1896 = vld [vmem:[#allocation4 + $0x38] sm:$0xff]
        %v1897 = vld [vmem:[#allocation4 + $0x40] sm:$0xff]
        %v1898 = vld [vmem:[#allocation4 + $0x48] sm:$0xff]
        %v1899 = vld [vmem:[#allocation4 + $0x50] sm:$0xff]
        %v1900 = vld [vmem:[#allocation4 + $0x58] sm:$0xff]
        %v1901 = vld [vmem:[#allocation4 + $0x60] sm:$0xff]
        %v1902 = vld [vmem:[#allocation4 + $0x68] sm:$0xff]
        %v1903 = vld [vmem:[#allocation4 + $0x70] sm:$0xff]
        %v1904 = vld [vmem:[#allocation4 + $0x78] sm:$0xff]
        %v1905 = vld [vmem:[#allocation4 + $0x80] sm:$0xff]
        %v1906 = vld [vmem:[#allocation4 + $0x88] sm:$0xff]
        %v1908 = vsel %vm989, %v1888, 0
        %1910 = vmatprep.subr.mxu0 %v1890
        %1911 = vmatpush1.msra.mxu0 %v1889
        %1912 = vmatprep.subr.mxu0 %v1892
        %1913 = vmatpush1.msra.mxu0 %v1891
        %1914 = vmatprep.subr.mxu0 %v1894
        %1915 = vmatpush1.msra.mxu0 %v1893
        %1916 = vmatprep.subr.mxu0 %v1896
        %1917 = vmatpush1.msra.mxu0 %v1895
        %1918 = vmatprep.subr.mxu0 %v1898
        %1919 = vmatpush1.msra.mxu0 %v1897
        %1920 = vmatprep.subr.mxu0 %v1900
        %1921 = vmatpush1.msra.mxu0 %v1899
        %1922 = vmatprep.subr.mxu0 %v1902
        %1923 = vmatpush1.msra.mxu0 %v1901
        %1924 = vmatprep.subr.mxu0 %v1904
        %1925 = vmatpush1.msra.mxu0 %v1903
        %1926 = vmatprep.subr.mxu0 %v1906
        %1927 = vmatpush1.msra.mxu0 %v1905
        %1928 = vmatprep.subr.mxu0 0.0
        %1929 = vmatpush1.msra.mxu0 0.0
        %1930 = vmatprep.subr.mxu0 0.0
        %1931 = vmatpush1.msra.mxu0 0.0
        %1932 = vmatprep.subr.mxu0 0.0
        %1933 = vmatpush1.msra.mxu0 0.0
        %1934 = vmatprep.subr.mxu0 0.0
        %1935 = vmatpush1.msra.mxu0 0.0
        %1936 = vmatprep.subr.mxu0 0.0
        %1937 = vmatpush1.msra.mxu0 0.0
        %1938 = vmatprep.subr.mxu0 0.0
        %1939 = vmatpush1.msra.mxu0 0.0
        %1940 = vmatprep.subr.mxu0 0.0
        %1941 = vmatpush1.msra.mxu0 0.0
        %1942 = vmatprep.subr.mxu0 0.0
        %1943 = vmatpush1.msra.mxu0 0.0
        %1944 = vmatprep.subr.mxu0 0.0
        %1945 = vmatpush1.msra.mxu0 0.0
        %1946 = vmatprep.subr.mxu0 0.0
        %1947 = vmatpush1.msra.mxu0 0.0
        %1948 = vmatprep.subr.mxu0 0.0
        %1949 = vmatpush1.msra.mxu0 0.0
        %1950 = vmatprep.subr.mxu0 0.0
        %1951 = vmatpush1.msra.mxu0 0.0
        %1952 = vmatprep.subr.mxu0 0.0
        %1953 = vmatpush1.msra.mxu0 0.0
        %1954 = vmatprep.subr.mxu0 0.0
        %1955 = vmatpush1.msra.mxu0 0.0
        %1956 = vmatprep.subr.mxu0 0.0
        %1957 = vmatpush1.msra.mxu0 0.0
        %1958 = vmatprep.subr.mxu0 0.0
        %1959 = vmatpush1.msra.mxu0 0.0
        %1960 = vmatprep.subr.mxu0 0.0
        %1961 = vmatpush1.msra.mxu0 0.0
        %1962 = vmatprep.subr.mxu0 0.0
        %1963 = vmatpush1.msra.mxu0 0.0
        %1964 = vmatprep.subr.mxu0 0.0
        %1965 = vmatpush1.msra.mxu0 0.0
        %1966 = vmatprep.subr.mxu0 0.0
        %1967 = vmatpush1.msra.mxu0 0.0
        %1968 = vmatprep.subr.mxu0 0.0
        %1969 = vmatpush1.msra.mxu0 0.0
        %1970 = vmatprep.subr.mxu0 0.0
        %1971 = vmatpush1.msra.mxu0 0.0
        %1972 = vmatprep.subr.mxu0 0.0
        %1973 = vmatpush1.msra.mxu0 0.0
        %1974 = vmatprep.mubr.f32.mxu0 0.0
        %1975 = vmatmul.mubr.f32.gmra.mrb[0].mxu0 %v1908
        %v1976 = vpop.f32.mrb[0].mxu0
        %v1977 = vadd.f32 0.0, %v1976
        %v1978 = vpop.f32.mrb[0].mxu0
        %v1979 = vadd.f32 0.0, %v1978
        %1980 = vdwg.mxu0
        %v1981 = vld [vmem:[%s10] sm:$0xff]
        %1983 = vset.pattern.permute.xlu0 0
        %1984 = vperm.xlu0 %1983, %v1981
        %v1985 = vpop.permute.xlu0 %1984
        %v1987 = vmul.f32 %v1977, %v1985
        %v1988 = vmul.f32 %v1979, %v1985
        %v1989 = vld [vmem:[%s11] sm:$0xff]
        %1991 = vset.pattern.permute.xlu0 0
        %1992 = vperm.xlu0 %1991, %v1989
        %v1993 = vpop.permute.xlu0 %1992
        %v1995 = vadd.f32 %v1987, %v1993
        %v1996 = vadd.f32 %v1988, %v1993
        %v1997 = vadd.f32 %v1995, %v1996
        %1998 = vadd.xlane.f32.xlu0 %v1997
        %v1999 = vpop.xlane.xlu0 %1998
        %v2000 = vrcp.pop 256.0
        %v2001 = vmul.f32 %v1999, %v2000
        %v2002 = vld [vmem:[%s13] sm:$0x3]
        %vm2003 = vcmask 64512
        %v2005 = vsel %vm2003, %v2002, 0
        %2007 = vmatprep.subr.mxu0 0.0
        %2008 = vmatpush1.msra.mxu0 %v2001
        %2009 = vmatprep.subr.mxu0 0.0
        %2010 = vmatpush1.msra.mxu0 0.0
        %2011 = vmatprep.subr.mxu0 0.0
        %2012 = vmatpush1.msra.mxu0 0.0
        %2013 = vmatprep.subr.mxu0 0.0
        %2014 = vmatpush1.msra.mxu0 0.0
        %2015 = vmatprep.subr.mxu0 0.0
        %2016 = vmatpush1.msra.mxu0 0.0
        %2017 = vmatprep.subr.mxu0 0.0
        %2018 = vmatpush1.msra.mxu0 0.0
        %2019 = vmatprep.subr.mxu0 0.0
        %2020 = vmatpush1.msra.mxu0 0.0
        %2021 = vmatprep.subr.mxu0 0.0
        %2022 = vmatpush1.msra.mxu0 0.0
        %2023 = vmatprep.subr.mxu0 0.0
        %2024 = vmatpush1.msra.mxu0 0.0
        %2025 = vmatprep.subr.mxu0 0.0
        %2026 = vmatpush1.msra.mxu0 0.0
        %2027 = vmatprep.subr.mxu0 0.0
        %2028 = vmatpush1.msra.mxu0 0.0
        %2029 = vmatprep.subr.mxu0 0.0
        %2030 = vmatpush1.msra.mxu0 0.0
        %2031 = vmatprep.subr.mxu0 0.0
        %2032 = vmatpush1.msra.mxu0 0.0
        %2033 = vmatprep.subr.mxu0 0.0
        %2034 = vmatpush1.msra.mxu0 0.0
        %2035 = vmatprep.subr.mxu0 0.0
        %2036 = vmatpush1.msra.mxu0 0.0
        %2037 = vmatprep.subr.mxu0 0.0
        %2038 = vmatpush1.msra.mxu0 0.0
        %2039 = vmatprep.subr.mxu0 0.0
        %2040 = vmatpush1.msra.mxu0 0.0
        %2041 = vmatprep.subr.mxu0 0.0
        %2042 = vmatpush1.msra.mxu0 0.0
        %2043 = vmatprep.subr.mxu0 0.0
        %2044 = vmatpush1.msra.mxu0 0.0
        %2045 = vmatprep.subr.mxu0 0.0
        %2046 = vmatpush1.msra.mxu0 0.0
        %2047 = vmatprep.subr.mxu0 0.0
        %2048 = vmatpush1.msra.mxu0 0.0
        %2049 = vmatprep.subr.mxu0 0.0
        %2050 = vmatpush1.msra.mxu0 0.0
        %2051 = vmatprep.subr.mxu0 0.0
        %2052 = vmatpush1.msra.mxu0 0.0
        %2053 = vmatprep.subr.mxu0 0.0
        %2054 = vmatpush1.msra.mxu0 0.0
        %2055 = vmatprep.subr.mxu0 0.0
        %2056 = vmatpush1.msra.mxu0 0.0
        %2057 = vmatprep.subr.mxu0 0.0
        %2058 = vmatpush1.msra.mxu0 0.0
        %2059 = vmatprep.subr.mxu0 0.0
        %2060 = vmatpush1.msra.mxu0 0.0
        %2061 = vmatprep.subr.mxu0 0.0
        %2062 = vmatpush1.msra.mxu0 0.0
        %2063 = vmatprep.subr.mxu0 0.0
        %2064 = vmatpush1.msra.mxu0 0.0
        %2065 = vmatprep.subr.mxu0 0.0
        %2066 = vmatpush1.msra.mxu0 0.0
        %2067 = vmatprep.subr.mxu0 0.0
        %2068 = vmatpush1.msra.mxu0 0.0
        %2069 = vmatprep.subr.mxu0 0.0
        %2070 = vmatpush1.msra.mxu0 0.0
        %2071 = vmatprep.mubr.f32.mxu0 0.0
        %2072 = vmatmul.mubr.f32.gmra.mrb[0].mxu0 %v2005
        %v2073 = vpop.f32.mrb[0].mxu0
        %v2074 = vadd.f32 0.0, %v2073
        %v2075 = vpop.f32.mrb[0].mxu0
        %2076 = vdwg.mxu0
        %v2077 = vld [vmem:[%s14] sm:$0x3]
        %v2078 = vmul.f32 %v2074, %v2077
        %v2079 = vld [vmem:[%s15] sm:$0x3]
        %v2080 = vadd.f32 %v2078, %v2079
        %v2081 = vmax.f32 %v2080, 0.0
        %v2082 = vld [vmem:[%s16] sm:$0xff]
        %v2084 = vsel %vm716, %v2082, 0
        %vm2086 = vcmask 1041408
        %v2088 = vsel %vm2086, %v2081, 0
        %2090 = vmatprep.subr.mxu0 0.0
        %2091 = vmatpush1.msra.mxu0 %v2088
        %2092 = vmatprep.subr.mxu0 0.0
        %2093 = vmatpush1.msra.mxu0 0.0
        %2094 = vmatprep.subr.mxu0 0.0
        %2095 = vmatpush1.msra.mxu0 0.0
        %2096 = vmatprep.subr.mxu0 0.0
        %2097 = vmatpush1.msra.mxu0 0.0
        %2098 = vmatprep.subr.mxu0 0.0
        %2099 = vmatpush1.msra.mxu0 0.0
        %2100 = vmatprep.subr.mxu0 0.0
        %2101 = vmatpush1.msra.mxu0 0.0
        %2102 = vmatprep.subr.mxu0 0.0
        %2103 = vmatpush1.msra.mxu0 0.0
        %2104 = vmatprep.subr.mxu0 0.0
        %2105 = vmatpush1.msra.mxu0 0.0
        %2106 = vmatprep.subr.mxu0 0.0
        %2107 = vmatpush1.msra.mxu0 0.0
        %2108 = vmatprep.subr.mxu0 0.0
        %2109 = vmatpush1.msra.mxu0 0.0
        %2110 = vmatprep.subr.mxu0 0.0
        %2111 = vmatpush1.msra.mxu0 0.0
        %2112 = vmatprep.subr.mxu0 0.0
        %2113 = vmatpush1.msra.mxu0 0.0
        %2114 = vmatprep.subr.mxu0 0.0
        %2115 = vmatpush1.msra.mxu0 0.0
        %2116 = vmatprep.subr.mxu0 0.0
        %2117 = vmatpush1.msra.mxu0 0.0
        %2118 = vmatprep.subr.mxu0 0.0
        %2119 = vmatpush1.msra.mxu0 0.0
        %2120 = vmatprep.subr.mxu0 0.0
        %2121 = vmatpush1.msra.mxu0 0.0
        %2122 = vmatprep.subr.mxu0 0.0
        %2123 = vmatpush1.msra.mxu0 0.0
        %2124 = vmatprep.subr.mxu0 0.0
        %2125 = vmatpush1.msra.mxu0 0.0
        %2126 = vmatprep.subr.mxu0 0.0
        %2127 = vmatpush1.msra.mxu0 0.0
        %2128 = vmatprep.subr.mxu0 0.0
        %2129 = vmatpush1.msra.mxu0 0.0
        %2130 = vmatprep.subr.mxu0 0.0
        %2131 = vmatpush1.msra.mxu0 0.0
        %2132 = vmatprep.subr.mxu0 0.0
        %2133 = vmatpush1.msra.mxu0 0.0
        %2134 = vmatprep.subr.mxu0 0.0
        %2135 = vmatpush1.msra.mxu0 0.0
        %2136 = vmatprep.subr.mxu0 0.0
        %2137 = vmatpush1.msra.mxu0 0.0
        %2138 = vmatprep.subr.mxu0 0.0
        %2139 = vmatpush1.msra.mxu0 0.0
        %2140 = vmatprep.subr.mxu0 0.0
        %2141 = vmatpush1.msra.mxu0 0.0
        %2142 = vmatprep.subr.mxu0 0.0
        %2143 = vmatpush1.msra.mxu0 0.0
        %2144 = vmatprep.subr.mxu0 0.0
        %2145 = vmatpush1.msra.mxu0 0.0
        %2146 = vmatprep.subr.mxu0 0.0
        %2147 = vmatpush1.msra.mxu0 0.0
        %2148 = vmatprep.subr.mxu0 0.0
        %2149 = vmatpush1.msra.mxu0 0.0
        %2150 = vmatprep.subr.mxu0 0.0
        %2151 = vmatpush1.msra.mxu0 0.0
        %2152 = vmatprep.subr.mxu0 0.0
        %2153 = vmatpush1.msra.mxu0 0.0
        %2154 = vmatprep.mubr.f32.mxu0 0.0
        %2155 = vmatmul.mubr.f32.gmra.mrb[0].mxu0 %v2084
        %v2156 = vpop.f32.mrb[0].mxu0
        %v2157 = vadd.f32 0.0, %v2156
        %v2158 = vpop.f32.mrb[0].mxu0
        %2159 = vdwg.mxu0
        %v2160 = vld [vmem:[%s17] sm:$0xff]
        %v2161 = vmul.f32 %v2157, %v2160
        %v2162 = vld [vmem:[%s18] sm:$0xff]
        %v2163 = vadd.f32 %v2161, %v2162
        %v2164 = vrcp.pop 6.0
        %v2165 = vmul.f32 %v2163, %v2164
        %v2166 = vadd.f32 %v2165, 0.5
        %v2167 = vmax.f32 %v2166, 0.0
        %v2168 = vmin.f32 %v2167, 1.0
        %v2169 = vld [vmem:[%s600] sm:$0xff]
        %v2170 = vld [vmem:[%s12] sm:$0xff]
        %v2172 = vcombine.high %v2169, %v2169
        %vm2173 = vcmask 31744
        %v2175 = vsel %vm2173, %v2170, 0
        %vm2177 = vcmask 1043456
        %v2178 = vsel %vm2177, %v2169, 0
        %v2180 = vsel %vm2177, %v2172, 0
        %2182 = vmatprep.subr.mxu0 %v2180
        %2183 = vmatpush1.msra.mxu0 %v2178
        %2184 = vmatprep.subr.mxu0 0.0
        %2185 = vmatpush1.msra.mxu0 0.0
        %2186 = vmatprep.subr.mxu0 0.0
        %2187 = vmatpush1.msra.mxu0 0.0
        %2188 = vmatprep.subr.mxu0 0.0
        %2189 = vmatpush1.msra.mxu0 0.0
        %2190 = vmatprep.subr.mxu0 0.0
        %2191 = vmatpush1.msra.mxu0 0.0
        %2192 = vmatprep.subr.mxu0 0.0
        %2193 = vmatpush1.msra.mxu0 0.0
        %2194 = vmatprep.subr.mxu0 0.0
        %2195 = vmatpush1.msra.mxu0 0.0
        %2196 = vmatprep.subr.mxu0 0.0
        %2197 = vmatpush1.msra.mxu0 0.0
        %2198 = vmatprep.subr.mxu0 0.0
        %2199 = vmatpush1.msra.mxu0 0.0
        %2200 = vmatprep.subr.mxu0 0.0
        %2201 = vmatpush1.msra.mxu0 0.0
        %2202 = vmatprep.subr.mxu0 0.0
        %2203 = vmatpush1.msra.mxu0 0.0
        %2204 = vmatprep.subr.mxu0 0.0
        %2205 = vmatpush1.msra.mxu0 0.0
        %2206 = vmatprep.subr.mxu0 0.0
        %2207 = vmatpush1.msra.mxu0 0.0
        %2208 = vmatprep.subr.mxu0 0.0
        %2209 = vmatpush1.msra.mxu0 0.0
        %2210 = vmatprep.subr.mxu0 0.0
        %2211 = vmatpush1.msra.mxu0 0.0
        %2212 = vmatprep.subr.mxu0 0.0
        %2213 = vmatpush1.msra.mxu0 0.0
        %2214 = vmatprep.subr.mxu0 0.0
        %2215 = vmatpush1.msra.mxu0 0.0
        %2216 = vmatprep.subr.mxu0 0.0
        %2217 = vmatpush1.msra.mxu0 0.0
        %2218 = vmatprep.subr.mxu0 0.0
        %2219 = vmatpush1.msra.mxu0 0.0
        %2220 = vmatprep.subr.mxu0 0.0
        %2221 = vmatpush1.msra.mxu0 0.0
        %2222 = vmatprep.subr.mxu0 0.0
        %2223 = vmatpush1.msra.mxu0 0.0
        %2224 = vmatprep.subr.mxu0 0.0
        %2225 = vmatpush1.msra.mxu0 0.0
        %2226 = vmatprep.subr.mxu0 0.0
        %2227 = vmatpush1.msra.mxu0 0.0
        %2228 = vmatprep.subr.mxu0 0.0
        %2229 = vmatpush1.msra.mxu0 0.0
        %2230 = vmatprep.subr.mxu0 0.0
        %2231 = vmatpush1.msra.mxu0 0.0
        %2232 = vmatprep.subr.mxu0 0.0
        %2233 = vmatpush1.msra.mxu0 0.0
        %2234 = vmatprep.subr.mxu0 0.0
        %2235 = vmatpush1.msra.mxu0 0.0
        %2236 = vmatprep.subr.mxu0 0.0
        %2237 = vmatpush1.msra.mxu0 0.0
        %2238 = vmatprep.subr.mxu0 0.0
        %2239 = vmatpush1.msra.mxu0 0.0
        %2240 = vmatprep.subr.mxu0 0.0
        %2241 = vmatpush1.msra.mxu0 0.0
        %2242 = vmatprep.subr.mxu0 0.0
        %2243 = vmatpush1.msra.mxu0 0.0
        %2244 = vmatprep.subr.mxu0 0.0
        %2245 = vmatpush1.msra.mxu0 0.0
        %2246 = vmatprep.mubr.f32.mxu0 0.0
        %2247 = vmatmul.mubr.f32.gmra.mrb[0].mxu0 %v2175
        %v2248 = vpop.f32.mrb[0].mxu0
        %v2249 = vadd.f32 0.0, %v2248
        %v2250 = vpop.f32.mrb[0].mxu0
        %v2251 = vadd.f32 0.0, %v2250
        %2252 = vdwg.mxu0
        %2254 = vset.pattern.permute.xlu0 0
        %2255 = vperm.xlu0 %2254, %v2168
        %v2256 = vpop.permute.xlu0 %2255
        %v2258 = vmul.f32 %v1995, %v2256
        %v2259 = vmul.f32 %v1996, %v2256
        %v2260 = vadd.f32 %v2258, %v2249
        %v2261 = vadd.f32 %v2259, %v2251
        %v2262 = vmax.f32 %v2260, 0.0
        %v2263 = vmax.f32 %v2261, 0.0
        %2264 = vst [vmem:[%s595] sm:$0xff] %v2262
        %2265 = vst [vmem:[%s595 + $0x8] sm:$0xff] %v2263
        %s2266 = sand.u32 %s445, 1
        %s2267 = scalar_lea.sflag [#allocation6], %s2266
        %s2268 = sand.u32 %s445, 1
        %s2269 = smul.addr %s2268, 16
        %s2270 = scalar_lea.vmem [#allocation5], %s2269
        // Predicated region
        $region97: #{tpu_custom_call.1} parent=95 // pred_check
          %p2271 = pneg %p455
        $region98: #{tpu_custom_call.1} parent=95 // pred_check_branch
          %2273 = sbr.rel (%p2271) target = $region100
        $region99: #{tpu_custom_call.1} parent=95 // pred_region
          %s2275 = ssub.s32 256, 256
          %2276 = vsyncadd %s2267, %s2275
          %s2277 = smul.addr %s33, 2
          %s2278 = smul.addr %s2277, 128
          %s2279 = scalar_lea.hbm %s19, %s2278
          %s2281 = sshll.u32 %s2270, 4
          %s2282 = int_to_ptr.vmem [resolvable:$true] %s2281
          %2284 = dma.vmem_to_hbm [thread:$0]  %s2282, 256, %s2279, %s2267
        $region100: #{tpu_custom_call.1} parent=95 // pred_fallthru
          _
      $region96: #{tpu_custom_call.1} parent=5 // pred_fallthru
        _
      %p2285 = scmp.le.s32.totalorder 2, %s28
      // Predicated region
      $region101: #{tpu_custom_call.1} parent=5 // pred_check
        %p2286 = pneg %p2285
      $region102: #{tpu_custom_call.1} parent=5 // pred_check_branch
        %2288 = sbr.rel (%p2286) target = $region104
      $region103: #{tpu_custom_call.1} parent=5 // pred_region
        %s2289 = ssub.s32 %s28, 2
        // Predicated region
        $region105: #{tpu_custom_call.1} parent=103 // pred_check
          %p2290 = pneg %p461
        $region106: #{tpu_custom_call.1} parent=103 // pred_check_branch
          %2292 = sbr.rel (%p2290) target = $region108
        $region107: #{tpu_custom_call.1} parent=103 // pred_region
          %s2293 = sand.u32 %s446, 1
          %s2294 = scalar_lea.sflag [#allocation6], %s2293
          %s2295 = sand.u32 %s446, 1
          %s2296 = smul.addr %s2295, 16
          %s2297 = scalar_lea.vmem [#allocation5], %s2296
          %2298 = dma.done %s2294, 256
        $region108: #{tpu_custom_call.1} parent=103 // pred_fallthru
          _
      $region104: #{tpu_custom_call.1} parent=5 // pred_fallthru
        _
    $region6: #{tpu_custom_call.1} parent=1 // loop_footer
      %s32 = sadd.s32 1, %s28
    $region7: #{tpu_custom_call.1} parent=1 // loop_footer_branch
      %27 = sbr.rel target = $region3
    $region8: #{tpu_custom_call.1} parent=1 // loop_exit
      _
    %2299 = vsyncpa [#allocation6], 1
    %s2300 = scalar_lea.sflag [#allocation6], 1
    %2301 = vsyncpa %s2300, 1

</llo_original>
